<compile_context>
chip_gen: v5e
topology: v5e:2x2
jax: 0.10.0
libtpu: 0.0.40
codegen_flags: <defaults>
</compile_context>

<pallas_src>
import jax
import jax.numpy as jnp
from jax.experimental import pallas as pl
from jax.experimental.pallas import tpu as pltpu


_VMEM_LIMIT = 32 * 1024 * 1024  # explicit scoped-VMEM budget (raise for prod sizes)


# ---------------------- fused wavefront LSTM recurrence ----------------------
def _make_lstm_kernel(num_layers, seq_len, hidden):
    L, S, H = num_layers, seq_len, hidden

    def kernel(x_ref, *args):
        # args = [wih_0, whh_0, b_0, ..., wih_{L-1}, whh_{L-1}, b_{L-1}, h_out_ref]
        wih_refs = [args[3 * l + 0] for l in range(L)]
        whh_refs = [args[3 * l + 1] for l in range(L)]
        b_refs = [args[3 * l + 2] for l in range(L)]
        h_out_ref = args[3 * L]

        BB = x_ref.shape[1]
        E = x_ref.shape[2]

        # Weights stay resident across the whole sequence.
        W_ih = [wih_refs[l][...] for l in range(L)]
        W_hh = [whh_refs[l][...] for l in range(L)]
        # Hoist bias broadcasts out of the unrolled loop (no CSE of broadcasts).
        B_g = [None] + [jnp.broadcast_to(b_refs[l][...], (BB, 4 * H))
                        for l in range(1, L)]

        # Layer-0 input contributions for ALL timesteps: one MXU-friendly
        # matmul, completely off the serial recurrence critical path.
        x_all = x_ref[...].reshape(S * BB, E)
        ig0 = (jnp.dot(x_all, W_ih[0], preferred_element_type=jnp.float32)
               + b_refs[0][...]).reshape(S, BB, 4 * H)

        def cell(pre, h, c, whh):
            # Single recurrent matmul on the critical path.
            gates = pre + jnp.dot(h, whh, preferred_element_type=jnp.float32)
            # One full-vreg sigmoid; g-gate pre-activations were scaled by 2 at
            # init so tanh(z) = 2*sigmoid(2z) - 1  (halves EUP work).
            sg = jax.nn.sigmoid(gates)
            i_g = sg[:, 0:H]
            f_g = sg[:, H:2 * H]
            g_g = 2.0 * sg[:, 2 * H:3 * H] - 1.0
            o_g = sg[:, 3 * H:4 * H]
            c_new = f_g * c + i_g * g_g
            h_new = o_g * jnp.tanh(c_new)
            return h_new, c_new

        h = [jnp.zeros((BB, H), jnp.float32) for _ in range(L)]
        c = [jnp.zeros((BB, H), jnp.float32) for _ in range(L)]

        # Wavefront: at iteration t, layer l processes timestep t - l.  Layers
        # are visited top-down so layer l reads layer l-1's state from the
        # PREVIOUS iteration; the L cell updates inside one iteration are
        # mutually independent -> L parallel matmul/EUP chains per iteration,
        # serial depth S + L - 1 instead of S * L.
        # TODO(synk): partially unroll (lax.fori_loop, unroll=4-8) for large S.
        for t in range(S + L - 1):
            for l in range(L - 1, -1, -1):
                s = t - l
                if s < 0 or s >= S:
                    continue
                if l == 0:
                    pre = ig0[s]
                else:
                    pre = (jnp.dot(h[l - 1], W_ih[l],
                                   preferred_element_type=jnp.float32) + B_g[l])
                h[l], c[l] = cell(pre, h[l], c[l], W_hh[l])
                if l == L - 1:
                    h_out_ref[s] = h[l]

    return kernel


# ----------------------- grid-tiled vocab projection -------------------------
def _proj_kernel(h_ref, w_ref, b_ref, o_ref):
    o_ref[...] = (jnp.dot(h_ref[...], w_ref[...],
                          preferred_element_type=jnp.float32) + b_ref[...])


# ------------------------------ RNN forward ----------------------------------
def rnn_forward(params, features, captions):
    B, T = captions.shape
    S = T + 1
    H = params["lstm"][0]["whh_T"].shape[0]
    V = params["w_out_T"].shape[1]
    L = len(params["lstm"])
    E = params["embed"].shape[1]

    # Embedding gather + feature prepend in the wrapper (one XLA gather),
    # built time-major so the recurrence kernel needs no input transpose.
    emb_tm = jnp.take(params["embed"], captions.T.astype(jnp.int32), axis=0)  # (T,B,E)
    x_tm = jnp.concatenate([features[None, :, :], emb_tm], axis=0)            # (S,B,E)

    # Pad batch to the sublane multiple (8) for dense vreg occupancy.
    BB = 8
    Bp = ((B + BB - 1) // BB) * BB
    if Bp != B:
        x_tm = jnp.pad(x_tm, ((0, 0), (0, Bp - B), (0, 0)))

    # ---- pallas_call 1: fused wavefront LSTM recurrence ----------------------
    lstm_inputs = [x_tm]
    in_specs = [pl.BlockSpec((S, BB, E), lambda i: (0, i, 0))]
    for layer in params["lstm"]:
        lstm_inputs += [layer["wih_k"], layer["whh_k"], layer["b_k"]]
        in_specs += [
            pl.BlockSpec(layer["wih_k"].shape, lambda i: (0, 0)),
            pl.BlockSpec(layer["whh_k"].shape, lambda i: (0, 0)),
            pl.BlockSpec(layer["b_k"].shape, lambda i: (0, 0)),
        ]

    h_seq = pl.pallas_call(
        _make_lstm_kernel(L, S, H),
        out_shape=jax.ShapeDtypeStruct((S, Bp, H), jnp.float32),
        grid_spec=pltpu.PrefetchScalarGridSpec(
            num_scalar_prefetch=0,
            grid=(Bp // BB,),   # batch blocks: "parallel" -> both TCs on v7x when B>=16
            in_specs=in_specs,
            out_specs=pl.BlockSpec((S, BB, H), lambda i: (0, i, 0)),
        ),
        compiler_params=pltpu.CompilerParams(
            dimension_semantics=("parallel",),
            vmem_limit_bytes=_VMEM_LIMIT),
    )(*lstm_inputs)

    # ---- pallas_call 2: tiled (S*Bp, H) @ (H, V) vocab projection ------------
    # Rows are (batch, time)-major so the logits come out batch-first and no
    # wrapper transpose of the LARGE logits is needed; only the small hidden
    # slab is transposed.
    h_rows = jnp.transpose(h_seq, (1, 0, 2)).reshape(Bp * S, H)

    TM, TV = 128, 128
    M = Bp * S
    Mp = ((M + TM - 1) // TM) * TM
    Vp = ((V + TV - 1) // TV) * TV          # lane-dense logits tiles
    if Mp != M:
        h_rows = jnp.pad(h_rows, ((0, Mp - M), (0, 0)))
    w_out = params["w_out_T"]
    b_out = params["b_out"].reshape(1, V)
    if Vp != V:
        w_out = jnp.pad(w_out, ((0, 0), (0, Vp - V)))
        b_out = jnp.pad(b_out, ((0, 0), (0, Vp - V)))

    logits = pl.pallas_call(
        _proj_kernel,
        out_shape=jax.ShapeDtypeStruct((Mp, Vp), jnp.float32),
        grid_spec=pltpu.PrefetchScalarGridSpec(
            num_scalar_prefetch=0,
            grid=(Mp // TM, Vp // TV),
            in_specs=[pl.BlockSpec((TM, H), lambda i, j: (i, 0)),
                      pl.BlockSpec((H, TV), lambda i, j: (0, j)),
                      pl.BlockSpec((1, TV), lambda i, j: (0, j))],
            out_specs=pl.BlockSpec((TM, TV), lambda i, j: (i, j)),
        ),
        compiler_params=pltpu.CompilerParams(
            dimension_semantics=("parallel", "parallel"),
            vmem_limit_bytes=_VMEM_LIMIT),
    )(h_rows, w_out, b_out)

    # (Mp, Vp) -> (B, S, V); drop row / vocab padding.  No logits transpose.
    return logits[:M, :V].reshape(Bp, S, V)[:B]


# ------------------------- deterministic param init --------------------------
def init_params(key, E, H, V, L):
    keys = jax.random.split(key, 3 + 4 * L)
    k = 1.0 / jnp.sqrt(H)
    params = {"embed": jax.random.normal(keys[0], (V, E), dtype=jnp.float32)}

    def scale_g(w):
        # Pre-scale the g-gate (cell-input) columns by 2 so the kernel uses a
        # single sigmoid and recovers g via tanh(z) = 2*sigmoid(2z) - 1.
        return w.at[..., 2 * H:3 * H].multiply(2.0)

    lstm, idx = [], 1
    for layer in range(L):
        in_sz = E if layer == 0 else H
        wih = jax.random.uniform(keys[idx], (4 * H, in_sz), minval=-k, maxval=k); idx += 1
        whh = jax.random.uniform(keys[idx], (4 * H, H), minval=-k, maxval=k); idx += 1
        bih = jax.random.uniform(keys[idx], (4 * H,), minval=-k, maxval=k); idx += 1
        bhh = jax.random.uniform(keys[idx], (4 * H,), minval=-k, maxval=k); idx += 1
        wih_T = wih.T.astype(jnp.float32)                    # (in, 4H)
        whh_T = whh.T.astype(jnp.float32)                    # (H, 4H)
        b = (bih + bhh).reshape(1, 4 * H).astype(jnp.float32)
        lstm.append({
            "wih_T": wih_T, "whh_T": whh_T, "b": b,          # reference copies
            # TODO(synk): cast the *_k kernel weights to bf16 at production sizes.
            "wih_k": scale_g(wih_T), "whh_k": scale_g(whh_T), "b_k": scale_g(b),
        })
    params["lstm"] = lstm
    w_out = jax.random.uniform(keys[idx], (V, H), minval=-k, maxval=k); idx += 1
    b_out = jax.random.uniform(keys[idx], (V,), minval=-k, maxval=k)
    params["w_out_T"] = w_out.T.astype(jnp.float32)          # (H, V)
    params["b_out"] = b_out.astype(jnp.float32)
    return params


# ---------------------------- pure-JAX reference ------------------------------
def rnn_reference(params, features, captions):
    emb = params["embed"][captions]                              # (B, T, E)
    x = jnp.concatenate([features[:, None, :], emb], axis=1)     # (B, S, E)
    B, S, _ = x.shape
    H = params["lstm"][0]["whh_T"].shape[0]
    for layer in params["lstm"]:
        def step(carry, xt, layer=layer):
            h, c = carry
            gates = xt @ layer["wih_T"] + h @ layer["whh_T"] + layer["b"]
            i = jax.nn.sigmoid(gates[:, :H])
            f = jax.nn.sigmoid(gates[:, H:2 * H])
            g = jnp.tanh(gates[:, 2 * H:3 * H])
            o = jax.nn.sigmoid(gates[:, 3 * H:])
            c = f * c + i * g
            h = o * jnp.tanh(c)
            return (h, c), h
        init = (jnp.zeros((B, H)), jnp.zeros((B, H)))
        _, hs = jax.lax.scan(step, init, jnp.transpose(x, (1, 0, 2)))
        x = jnp.transpose(hs, (1, 0, 2))
    logits = x.reshape(B * S, H) @ params["w_out_T"] + params["b_out"]
    return logits.reshape(B, S, -1)


if __name__ == "__main__":
    embed_size, hidden_size, vocab_size, num_layers = 32, 32, 128, 2
    B, T = 2, 8

    key = jax.random.PRNGKey(0)
    kp, kf, kc = jax.random.split(key, 3)
    params = init_params(kp, embed_size, hidden_size, vocab_size, num_layers)
    features = jax.random.normal(kf, (B, embed_size), dtype=jnp.float32)
    captions = jax.random.randint(kc, (B, T), 0, vocab_size, dtype=jnp.int32)

    out = jax.block_until_ready(rnn_forward(params, features, captions))

    assert out.shape == (B, T + 1, vocab_size), out.shape
    ref = rnn_reference(params, features, captions)
    err = float(jnp.max(jnp.abs(out - ref)))
    assert jnp.allclose(out, ref, atol=5e-4, rtol=5e-4), f"mismatch vs reference: {err}"
    print("KERNEL_OK")
</pallas_src>

<mosaic_0001>
module attributes {stable_mosaic.version = 11 : i64} {
  func.func @kernel(%arg0: i32, %arg1: memref<9x8x32xf32, #tpu.memory_space<vmem>>, %arg2: memref<32x128xf32, #tpu.memory_space<vmem>>, %arg3: memref<32x128xf32, #tpu.memory_space<vmem>>, %arg4: memref<1x128xf32, #tpu.memory_space<vmem>>, %arg5: memref<32x128xf32, #tpu.memory_space<vmem>>, %arg6: memref<32x128xf32, #tpu.memory_space<vmem>>, %arg7: memref<1x128xf32, #tpu.memory_space<vmem>>, %arg8: memref<9x8x32xf32, #tpu.memory_space<vmem>>) attributes {dimension_semantics = [#tpu.dimension_semantics<parallel>], iteration_bounds = array<i64: 1>, scalar_prefetch = 0 : i64, scratch_operands = 0 : i64, tpu.core_type = #tpu.core_type<tc>, window_params = [{transform_indices = @transform_0, window_bounds = array<i64: 9, 8, 32>}, {pipeline_mode = #tpu.pipeline_mode<synchronous>, transform_indices = @transform_1, window_bounds = array<i64: 32, 128>}, {pipeline_mode = #tpu.pipeline_mode<synchronous>, transform_indices = @transform_2, window_bounds = array<i64: 32, 128>}, {pipeline_mode = #tpu.pipeline_mode<synchronous>, transform_indices = @transform_3, window_bounds = array<i64: 1, 128>}, {pipeline_mode = #tpu.pipeline_mode<synchronous>, transform_indices = @transform_4, window_bounds = array<i64: 32, 128>}, {pipeline_mode = #tpu.pipeline_mode<synchronous>, transform_indices = @transform_5, window_bounds = array<i64: 32, 128>}, {pipeline_mode = #tpu.pipeline_mode<synchronous>, transform_indices = @transform_6, window_bounds = array<i64: 1, 128>}, {transform_indices = @transform_7, window_bounds = array<i64: 9, 8, 32>}]} {
    %c0 = arith.constant 0 : index
    %c0_0 = arith.constant 0 : index
    %0 = vector.load %arg2[%c0, %c0_0] : memref<32x128xf32, #tpu.memory_space<vmem>>, vector<32x128xf32>
    %c0_1 = arith.constant 0 : index
    %c0_2 = arith.constant 0 : index
    %1 = vector.load %arg5[%c0_1, %c0_2] : memref<32x128xf32, #tpu.memory_space<vmem>>, vector<32x128xf32>
    %c0_3 = arith.constant 0 : index
    %c0_4 = arith.constant 0 : index
    %2 = vector.load %arg3[%c0_3, %c0_4] : memref<32x128xf32, #tpu.memory_space<vmem>>, vector<32x128xf32>
    %c0_5 = arith.constant 0 : index
    %c0_6 = arith.constant 0 : index
    %3 = vector.load %arg6[%c0_5, %c0_6] : memref<32x128xf32, #tpu.memory_space<vmem>>, vector<32x128xf32>
    %c0_7 = arith.constant 0 : index
    %c0_8 = arith.constant 0 : index
    %4 = vector.load %arg7[%c0_7, %c0_8] : memref<1x128xf32, #tpu.memory_space<vmem>>, vector<1x128xf32>
    %5 = vector.shape_cast %4 : vector<1x128xf32> to vector<1x128xf32>
    %6 = vector.broadcast %5 : vector<1x128xf32> to vector<8x128xf32>
    %c0_9 = arith.constant 0 : index
    %c0_10 = arith.constant 0 : index
    %c0_11 = arith.constant 0 : index
    %7 = vector.load %arg1[%c0_9, %c0_10, %c0_11] : memref<9x8x32xf32, #tpu.memory_space<vmem>>, vector<9x8x32xf32>
    %8 = vector.shape_cast %7 : vector<9x8x32xf32> to vector<72x32xf32>
    %cst = arith.constant dense<0.000000e+00> : vector<72x128xf32>
    %9 = tpu.matmul %8, %0, %cst {dimension_numbers = #tpu.dot_dimension_numbers<[1], [0], [0], [1], [0, 0, 1, 1], [], []>} : vector<72x32xf32>, vector<32x128xf32>, vector<72x128xf32> -> vector<72x128xf32>
    %c0_12 = arith.constant 0 : index
    %c0_13 = arith.constant 0 : index
    %10 = vector.load %arg4[%c0_12, %c0_13] : memref<1x128xf32, #tpu.memory_space<vmem>>, vector<1x128xf32>
    %11 = vector.broadcast %10 : vector<1x128xf32> to vector<72x128xf32>
    %12 = arith.addf %9, %11 : vector<72x128xf32>
    %13 = vector.shape_cast %12 : vector<72x128xf32> to vector<9x8x128xf32>
    %cst_14 = arith.constant 0.000000e+00 : f32
    %14 = vector.broadcast %cst_14 : f32 to vector<8x32xf32>
    %cst_15 = arith.constant 0.000000e+00 : f32
    %15 = vector.broadcast %cst_15 : f32 to vector<8x32xf32>
    %cst_16 = arith.constant 0.000000e+00 : f32
    %16 = vector.broadcast %cst_16 : f32 to vector<8x32xf32>
    %cst_17 = arith.constant 0.000000e+00 : f32
    %17 = vector.broadcast %cst_17 : f32 to vector<8x32xf32>
    %18 = vector.extract_strided_slice %13 {offsets = [0, 0, 0], sizes = [1, 8, 128], strides = [1, 1, 1]} : vector<9x8x128xf32> to vector<1x8x128xf32>
    %19 = vector.shape_cast %18 : vector<1x8x128xf32> to vector<8x128xf32>
    %cst_18 = arith.constant dense<0.000000e+00> : vector<8x128xf32>
    %20 = tpu.matmul %14, %2, %cst_18 {dimension_numbers = #tpu.dot_dimension_numbers<[1], [0], [0], [1], [0, 0, 1, 1], [], []>} : vector<8x32xf32>, vector<32x128xf32>, vector<8x128xf32> -> vector<8x128xf32>
    %21 = arith.addf %19, %20 : vector<8x128xf32>
    %22 = arith.negf %21 : vector<8x128xf32>
    %23 = math.exp %22 : vector<8x128xf32>
    %cst_19 = arith.constant 1.000000e+00 : f32
    %24 = vector.broadcast %cst_19 : f32 to vector<8x128xf32>
    %25 = arith.addf %24, %23 : vector<8x128xf32>
    %26 = arith.divf %24, %25 : vector<8x128xf32>
    %27 = vector.extract_strided_slice %26 {offsets = [0, 0], sizes = [8, 32], strides = [1, 1]} : vector<8x128xf32> to vector<8x32xf32>
    %28 = vector.extract_strided_slice %26 {offsets = [0, 32], sizes = [8, 32], strides = [1, 1]} : vector<8x128xf32> to vector<8x32xf32>
    %29 = vector.extract_strided_slice %26 {offsets = [0, 64], sizes = [8, 32], strides = [1, 1]} : vector<8x128xf32> to vector<8x32xf32>
    %cst_20 = arith.constant 2.000000e+00 : f32
    %30 = vector.broadcast %cst_20 : f32 to vector<8x32xf32>
    %31 = arith.mulf %30, %29 : vector<8x32xf32>
    %cst_21 = arith.constant 1.000000e+00 : f32
    %32 = vector.broadcast %cst_21 : f32 to vector<8x32xf32>
    %33 = arith.subf %31, %32 : vector<8x32xf32>
    %34 = vector.extract_strided_slice %26 {offsets = [0, 96], sizes = [8, 32], strides = [1, 1]} : vector<8x128xf32> to vector<8x32xf32>
    %35 = arith.mulf %28, %16 : vector<8x32xf32>
    %36 = arith.mulf %27, %33 : vector<8x32xf32>
    %37 = arith.addf %35, %36 : vector<8x32xf32>
    %38 = math.tanh %37 : vector<8x32xf32>
    %39 = arith.mulf %34, %38 : vector<8x32xf32>
    %cst_22 = arith.constant dense<0.000000e+00> : vector<8x128xf32>
    %40 = tpu.matmul %39, %1, %cst_22 {dimension_numbers = #tpu.dot_dimension_numbers<[1], [0], [0], [1], [0, 0, 1, 1], [], []>} : vector<8x32xf32>, vector<32x128xf32>, vector<8x128xf32> -> vector<8x128xf32>
    %41 = arith.addf %40, %6 : vector<8x128xf32>
    %cst_23 = arith.constant dense<0.000000e+00> : vector<8x128xf32>
    %42 = tpu.matmul %15, %3, %cst_23 {dimension_numbers = #tpu.dot_dimension_numbers<[1], [0], [0], [1], [0, 0, 1, 1], [], []>} : vector<8x32xf32>, vector<32x128xf32>, vector<8x128xf32> -> vector<8x128xf32>
    %43 = arith.addf %41, %42 : vector<8x128xf32>
    %44 = arith.negf %43 : vector<8x128xf32>
    %45 = math.exp %44 : vector<8x128xf32>
    %cst_24 = arith.constant 1.000000e+00 : f32
    %46 = vector.broadcast %cst_24 : f32 to vector<8x128xf32>
    %47 = arith.addf %46, %45 : vector<8x128xf32>
    %48 = arith.divf %46, %47 : vector<8x128xf32>
    %49 = vector.extract_strided_slice %48 {offsets = [0, 0], sizes = [8, 32], strides = [1, 1]} : vector<8x128xf32> to vector<8x32xf32>
    %50 = vector.extract_strided_slice %48 {offsets = [0, 32], sizes = [8, 32], strides = [1, 1]} : vector<8x128xf32> to vector<8x32xf32>
    %51 = vector.extract_strided_slice %48 {offsets = [0, 64], sizes = [8, 32], strides = [1, 1]} : vector<8x128xf32> to vector<8x32xf32>
    %cst_25 = arith.constant 2.000000e+00 : f32
    %52 = vector.broadcast %cst_25 : f32 to vector<8x32xf32>
    %53 = arith.mulf %52, %51 : vector<8x32xf32>
    %cst_26 = arith.constant 1.000000e+00 : f32
    %54 = vector.broadcast %cst_26 : f32 to vector<8x32xf32>
    %55 = arith.subf %53, %54 : vector<8x32xf32>
    %56 = vector.extract_strided_slice %48 {offsets = [0, 96], sizes = [8, 32], strides = [1, 1]} : vector<8x128xf32> to vector<8x32xf32>
    %57 = arith.mulf %50, %17 : vector<8x32xf32>
    %58 = arith.mulf %49, %55 : vector<8x32xf32>
    %59 = arith.addf %57, %58 : vector<8x32xf32>
    %60 = math.tanh %59 : vector<8x32xf32>
    %61 = arith.mulf %56, %60 : vector<8x32xf32>
    %c0_27 = arith.constant 0 : index
    %c0_28 = arith.constant 0 : index
    %c0_29 = arith.constant 0 : index
    %62 = vector.load %arg8[%c0_27, %c0_28, %c0_29] : memref<9x8x32xf32, #tpu.memory_space<vmem>>, vector<1x8x32xf32>
    %63 = vector.shape_cast %62 : vector<1x8x32xf32> to vector<8x32xf32>
    %64 = vector.shape_cast %61 : vector<8x32xf32> to vector<1x8x32xf32>
    tpu.vector_store %arg8[%c0_27, %c0_28, %c0_29], %64 {strides = array<i32>} : memref<9x8x32xf32, #tpu.memory_space<vmem>>, vector<1x8x32xf32>,
    %65 = vector.extract_strided_slice %13 {offsets = [1, 0, 0], sizes = [1, 8, 128], strides = [1, 1, 1]} : vector<9x8x128xf32> to vector<1x8x128xf32>
    %66 = vector.shape_cast %65 : vector<1x8x128xf32> to vector<8x128xf32>
    %cst_30 = arith.constant dense<0.000000e+00> : vector<8x128xf32>
    %67 = tpu.matmul %39, %2, %cst_30 {dimension_numbers = #tpu.dot_dimension_numbers<[1], [0], [0], [1], [0, 0, 1, 1], [], []>} : vector<8x32xf32>, vector<32x128xf32>, vector<8x128xf32> -> vector<8x128xf32>
    %68 = arith.addf %66, %67 : vector<8x128xf32>
    %69 = arith.negf %68 : vector<8x128xf32>
    %70 = math.exp %69 : vector<8x128xf32>
    %cst_31 = arith.constant 1.000000e+00 : f32
    %71 = vector.broadcast %cst_31 : f32 to vector<8x128xf32>
    %72 = arith.addf %71, %70 : vector<8x128xf32>
    %73 = arith.divf %71, %72 : vector<8x128xf32>
    %74 = vector.extract_strided_slice %73 {offsets = [0, 0], sizes = [8, 32], strides = [1, 1]} : vector<8x128xf32> to vector<8x32xf32>
    %75 = vector.extract_strided_slice %73 {offsets = [0, 32], sizes = [8, 32], strides = [1, 1]} : vector<8x128xf32> to vector<8x32xf32>
    %76 = vector.extract_strided_slice %73 {offsets = [0, 64], sizes = [8, 32], strides = [1, 1]} : vector<8x128xf32> to vector<8x32xf32>
    %cst_32 = arith.constant 2.000000e+00 : f32
    %77 = vector.broadcast %cst_32 : f32 to vector<8x32xf32>
    %78 = arith.mulf %77, %76 : vector<8x32xf32>
    %cst_33 = arith.constant 1.000000e+00 : f32
    %79 = vector.broadcast %cst_33 : f32 to vector<8x32xf32>
    %80 = arith.subf %78, %79 : vector<8x32xf32>
    %81 = vector.extract_strided_slice %73 {offsets = [0, 96], sizes = [8, 32], strides = [1, 1]} : vector<8x128xf32> to vector<8x32xf32>
    %82 = arith.mulf %75, %37 : vector<8x32xf32>
    %83 = arith.mulf %74, %80 : vector<8x32xf32>
    %84 = arith.addf %82, %83 : vector<8x32xf32>
    %85 = math.tanh %84 : vector<8x32xf32>
    %86 = arith.mulf %81, %85 : vector<8x32xf32>
    %cst_34 = arith.constant dense<0.000000e+00> : vector<8x128xf32>
    %87 = tpu.matmul %86, %1, %cst_34 {dimension_numbers = #tpu.dot_dimension_numbers<[1], [0], [0], [1], [0, 0, 1, 1], [], []>} : vector<8x32xf32>, vector<32x128xf32>, vector<8x128xf32> -> vector<8x128xf32>
    %88 = arith.addf %87, %6 : vector<8x128xf32>
    %cst_35 = arith.constant dense<0.000000e+00> : vector<8x128xf32>
    %89 = tpu.matmul %61, %3, %cst_35 {dimension_numbers = #tpu.dot_dimension_numbers<[1], [0], [0], [1], [0, 0, 1, 1], [], []>} : vector<8x32xf32>, vector<32x128xf32>, vector<8x128xf32> -> vector<8x128xf32>
    %90 = arith.addf %88, %89 : vector<8x128xf32>
    %91 = arith.negf %90 : vector<8x128xf32>
    %92 = math.exp %91 : vector<8x128xf32>
    %cst_36 = arith.constant 1.000000e+00 : f32
    %93 = vector.broadcast %cst_36 : f32 to vector<8x128xf32>
    %94 = arith.addf %93, %92 : vector<8x128xf32>
    %95 = arith.divf %93, %94 : vector<8x128xf32>
    %96 = vector.extract_strided_slice %95 {offsets = [0, 0], sizes = [8, 32], strides = [1, 1]} : vector<8x128xf32> to vector<8x32xf32>
    %97 = vector.extract_strided_slice %95 {offsets = [0, 32], sizes = [8, 32], strides = [1, 1]} : vector<8x128xf32> to vector<8x32xf32>
    %98 = vector.extract_strided_slice %95 {offsets = [0, 64], sizes = [8, 32], strides = [1, 1]} : vector<8x128xf32> to vector<8x32xf32>
    %cst_37 = arith.constant 2.000000e+00 : f32
    %99 = vector.broadcast %cst_37 : f32 to vector<8x32xf32>
    %100 = arith.mulf %99, %98 : vector<8x32xf32>
    %cst_38 = arith.constant 1.000000e+00 : f32
    %101 = vector.broadcast %cst_38 : f32 to vector<8x32xf32>
    %102 = arith.subf %100, %101 : vector<8x32xf32>
    %103 = vector.extract_strided_slice %95 {offsets = [0, 96], sizes = [8, 32], strides = [1, 1]} : vector<8x128xf32> to vector<8x32xf32>
    %104 = arith.mulf %97, %59 : vector<8x32xf32>
    %105 = arith.mulf %96, %102 : vector<8x32xf32>
    %106 = arith.addf %104, %105 : vector<8x32xf32>
    %107 = math.tanh %106 : vector<8x32xf32>
    %108 = arith.mulf %103, %107 : vector<8x32xf32>
    %c1 = arith.constant 1 : index
    %c0_39 = arith.constant 0 : index
    %c0_40 = arith.constant 0 : index
    %109 = vector.load %arg8[%c1, %c0_39, %c0_40] : memref<9x8x32xf32, #tpu.memory_space<vmem>>, vector<1x8x32xf32>
    %110 = vector.shape_cast %109 : vector<1x8x32xf32> to vector<8x32xf32>
    %111 = vector.shape_cast %108 : vector<8x32xf32> to vector<1x8x32xf32>
    tpu.vector_store %arg8[%c1, %c0_39, %c0_40], %111 {strides = array<i32>} : memref<9x8x32xf32, #tpu.memory_space<vmem>>, vector<1x8x32xf32>,
    %112 = vector.extract_strided_slice %13 {offsets = [2, 0, 0], sizes = [1, 8, 128], strides = [1, 1, 1]} : vector<9x8x128xf32> to vector<1x8x128xf32>
    %113 = vector.shape_cast %112 : vector<1x8x128xf32> to vector<8x128xf32>
    %cst_41 = arith.constant dense<0.000000e+00> : vector<8x128xf32>
    %114 = tpu.matmul %86, %2, %cst_41 {dimension_numbers = #tpu.dot_dimension_numbers<[1], [0], [0], [1], [0, 0, 1, 1], [], []>} : vector<8x32xf32>, vector<32x128xf32>, vector<8x128xf32> -> vector<8x128xf32>
    %115 = arith.addf %113, %114 : vector<8x128xf32>
    %116 = arith.negf %115 : vector<8x128xf32>
    %117 = math.exp %116 : vector<8x128xf32>
    %cst_42 = arith.constant 1.000000e+00 : f32
    %118 = vector.broadcast %cst_42 : f32 to vector<8x128xf32>
    %119 = arith.addf %118, %117 : vector<8x128xf32>
    %120 = arith.divf %118, %119 : vector<8x128xf32>
    %121 = vector.extract_strided_slice %120 {offsets = [0, 0], sizes = [8, 32], strides = [1, 1]} : vector<8x128xf32> to vector<8x32xf32>
    %122 = vector.extract_strided_slice %120 {offsets = [0, 32], sizes = [8, 32], strides = [1, 1]} : vector<8x128xf32> to vector<8x32xf32>
    %123 = vector.extract_strided_slice %120 {offsets = [0, 64], sizes = [8, 32], strides = [1, 1]} : vector<8x128xf32> to vector<8x32xf32>
    %cst_43 = arith.constant 2.000000e+00 : f32
    %124 = vector.broadcast %cst_43 : f32 to vector<8x32xf32>
    %125 = arith.mulf %124, %123 : vector<8x32xf32>
    %cst_44 = arith.constant 1.000000e+00 : f32
    %126 = vector.broadcast %cst_44 : f32 to vector<8x32xf32>
    %127 = arith.subf %125, %126 : vector<8x32xf32>
    %128 = vector.extract_strided_slice %120 {offsets = [0, 96], sizes = [8, 32], strides = [1, 1]} : vector<8x128xf32> to vector<8x32xf32>
    %129 = arith.mulf %122, %84 : vector<8x32xf32>
    %130 = arith.mulf %121, %127 : vector<8x32xf32>
    %131 = arith.addf %129, %130 : vector<8x32xf32>
    %132 = math.tanh %131 : vector<8x32xf32>
    %133 = arith.mulf %128, %132 : vector<8x32xf32>
    %cst_45 = arith.constant dense<0.000000e+00> : vector<8x128xf32>
    %134 = tpu.matmul %133, %1, %cst_45 {dimension_numbers = #tpu.dot_dimension_numbers<[1], [0], [0], [1], [0, 0, 1, 1], [], []>} : vector<8x32xf32>, vector<32x128xf32>, vector<8x128xf32> -> vector<8x128xf32>
    %135 = arith.addf %134, %6 : vector<8x128xf32>
    %cst_46 = arith.constant dense<0.000000e+00> : vector<8x128xf32>
    %136 = tpu.matmul %108, %3, %cst_46 {dimension_numbers = #tpu.dot_dimension_numbers<[1], [0], [0], [1], [0, 0, 1, 1], [], []>} : vector<8x32xf32>, vector<32x128xf32>, vector<8x128xf32> -> vector<8x128xf32>
    %137 = arith.addf %135, %136 : vector<8x128xf32>
    %138 = arith.negf %137 : vector<8x128xf32>
    %139 = math.exp %138 : vector<8x128xf32>
    %cst_47 = arith.constant 1.000000e+00 : f32
    %140 = vector.broadcast %cst_47 : f32 to vector<8x128xf32>
    %141 = arith.addf %140, %139 : vector<8x128xf32>
    %142 = arith.divf %140, %141 : vector<8x128xf32>
    %143 = vector.extract_strided_slice %142 {offsets = [0, 0], sizes = [8, 32], strides = [1, 1]} : vector<8x128xf32> to vector<8x32xf32>
    %144 = vector.extract_strided_slice %142 {offsets = [0, 32], sizes = [8, 32], strides = [1, 1]} : vector<8x128xf32> to vector<8x32xf32>
    %145 = vector.extract_strided_slice %142 {offsets = [0, 64], sizes = [8, 32], strides = [1, 1]} : vector<8x128xf32> to vector<8x32xf32>
    %cst_48 = arith.constant 2.000000e+00 : f32
    %146 = vector.broadcast %cst_48 : f32 to vector<8x32xf32>
    %147 = arith.mulf %146, %145 : vector<8x32xf32>
    %cst_49 = arith.constant 1.000000e+00 : f32
    %148 = vector.broadcast %cst_49 : f32 to vector<8x32xf32>
    %149 = arith.subf %147, %148 : vector<8x32xf32>
    %150 = vector.extract_strided_slice %142 {offsets = [0, 96], sizes = [8, 32], strides = [1, 1]} : vector<8x128xf32> to vector<8x32xf32>
    %151 = arith.mulf %144, %106 : vector<8x32xf32>
    %152 = arith.mulf %143, %149 : vector<8x32xf32>
    %153 = arith.addf %151, %152 : vector<8x32xf32>
    %154 = math.tanh %153 : vector<8x32xf32>
    %155 = arith.mulf %150, %154 : vector<8x32xf32>
    %c2 = arith.constant 2 : index
    %c0_50 = arith.constant 0 : index
    %c0_51 = arith.constant 0 : index
    %156 = vector.load %arg8[%c2, %c0_50, %c0_51] : memref<9x8x32xf32, #tpu.memory_space<vmem>>, vector<1x8x32xf32>
    %157 = vector.shape_cast %156 : vector<1x8x32xf32> to vector<8x32xf32>
    %158 = vector.shape_cast %155 : vector<8x32xf32> to vector<1x8x32xf32>
    tpu.vector_store %arg8[%c2, %c0_50, %c0_51], %158 {strides = array<i32>} : memref<9x8x32xf32, #tpu.memory_space<vmem>>, vector<1x8x32xf32>,
    %159 = vector.extract_strided_slice %13 {offsets = [3, 0, 0], sizes = [1, 8, 128], strides = [1, 1, 1]} : vector<9x8x128xf32> to vector<1x8x128xf32>
    %160 = vector.shape_cast %159 : vector<1x8x128xf32> to vector<8x128xf32>
    %cst_52 = arith.constant dense<0.000000e+00> : vector<8x128xf32>
    %161 = tpu.matmul %133, %2, %cst_52 {dimension_numbers = #tpu.dot_dimension_numbers<[1], [0], [0], [1], [0, 0, 1, 1], [], []>} : vector<8x32xf32>, vector<32x128xf32>, vector<8x128xf32> -> vector<8x128xf32>
    %162 = arith.addf %160, %161 : vector<8x128xf32>
    %163 = arith.negf %162 : vector<8x128xf32>
    %164 = math.exp %163 : vector<8x128xf32>
    %cst_53 = arith.constant 1.000000e+00 : f32
    %165 = vector.broadcast %cst_53 : f32 to vector<8x128xf32>
    %166 = arith.addf %165, %164 : vector<8x128xf32>
    %167 = arith.divf %165, %166 : vector<8x128xf32>
    %168 = vector.extract_strided_slice %167 {offsets = [0, 0], sizes = [8, 32], strides = [1, 1]} : vector<8x128xf32> to vector<8x32xf32>
    %169 = vector.extract_strided_slice %167 {offsets = [0, 32], sizes = [8, 32], strides = [1, 1]} : vector<8x128xf32> to vector<8x32xf32>
    %170 = vector.extract_strided_slice %167 {offsets = [0, 64], sizes = [8, 32], strides = [1, 1]} : vector<8x128xf32> to vector<8x32xf32>
    %cst_54 = arith.constant 2.000000e+00 : f32
    %171 = vector.broadcast %cst_54 : f32 to vector<8x32xf32>
    %172 = arith.mulf %171, %170 : vector<8x32xf32>
    %cst_55 = arith.constant 1.000000e+00 : f32
    %173 = vector.broadcast %cst_55 : f32 to vector<8x32xf32>
    %174 = arith.subf %172, %173 : vector<8x32xf32>
    %175 = vector.extract_strided_slice %167 {offsets = [0, 96], sizes = [8, 32], strides = [1, 1]} : vector<8x128xf32> to vector<8x32xf32>
    %176 = arith.mulf %169, %131 : vector<8x32xf32>
    %177 = arith.mulf %168, %174 : vector<8x32xf32>
    %178 = arith.addf %176, %177 : vector<8x32xf32>
    %179 = math.tanh %178 : vector<8x32xf32>
    %180 = arith.mulf %175, %179 : vector<8x32xf32>
    %cst_56 = arith.constant dense<0.000000e+00> : vector<8x128xf32>
    %181 = tpu.matmul %180, %1, %cst_56 {dimension_numbers = #tpu.dot_dimension_numbers<[1], [0], [0], [1], [0, 0, 1, 1], [], []>} : vector<8x32xf32>, vector<32x128xf32>, vector<8x128xf32> -> vector<8x128xf32>
    %182 = arith.addf %181, %6 : vector<8x128xf32>
    %cst_57 = arith.constant dense<0.000000e+00> : vector<8x128xf32>
    %183 = tpu.matmul %155, %3, %cst_57 {dimension_numbers = #tpu.dot_dimension_numbers<[1], [0], [0], [1], [0, 0, 1, 1], [], []>} : vector<8x32xf32>, vector<32x128xf32>, vector<8x128xf32> -> vector<8x128xf32>
    %184 = arith.addf %182, %183 : vector<8x128xf32>
    %185 = arith.negf %184 : vector<8x128xf32>
    %186 = math.exp %185 : vector<8x128xf32>
    %cst_58 = arith.constant 1.000000e+00 : f32
    %187 = vector.broadcast %cst_58 : f32 to vector<8x128xf32>
    %188 = arith.addf %187, %186 : vector<8x128xf32>
    %189 = arith.divf %187, %188 : vector<8x128xf32>
    %190 = vector.extract_strided_slice %189 {offsets = [0, 0], sizes = [8, 32], strides = [1, 1]} : vector<8x128xf32> to vector<8x32xf32>
    %191 = vector.extract_strided_slice %189 {offsets = [0, 32], sizes = [8, 32], strides = [1, 1]} : vector<8x128xf32> to vector<8x32xf32>
    %192 = vector.extract_strided_slice %189 {offsets = [0, 64], sizes = [8, 32], strides = [1, 1]} : vector<8x128xf32> to vector<8x32xf32>
    %cst_59 = arith.constant 2.000000e+00 : f32
    %193 = vector.broadcast %cst_59 : f32 to vector<8x32xf32>
    %194 = arith.mulf %193, %192 : vector<8x32xf32>
    %cst_60 = arith.constant 1.000000e+00 : f32
    %195 = vector.broadcast %cst_60 : f32 to vector<8x32xf32>
    %196 = arith.subf %194, %195 : vector<8x32xf32>
    %197 = vector.extract_strided_slice %189 {offsets = [0, 96], sizes = [8, 32], strides = [1, 1]} : vector<8x128xf32> to vector<8x32xf32>
    %198 = arith.mulf %191, %153 : vector<8x32xf32>
    %199 = arith.mulf %190, %196 : vector<8x32xf32>
    %200 = arith.addf %198, %199 : vector<8x32xf32>
    %201 = math.tanh %200 : vector<8x32xf32>
    %202 = arith.mulf %197, %201 : vector<8x32xf32>
    %c3 = arith.constant 3 : index
    %c0_61 = arith.constant 0 : index
    %c0_62 = arith.constant 0 : index
    %203 = vector.load %arg8[%c3, %c0_61, %c0_62] : memref<9x8x32xf32, #tpu.memory_space<vmem>>, vector<1x8x32xf32>
    %204 = vector.shape_cast %203 : vector<1x8x32xf32> to vector<8x32xf32>
    %205 = vector.shape_cast %202 : vector<8x32xf32> to vector<1x8x32xf32>
    tpu.vector_store %arg8[%c3, %c0_61, %c0_62], %205 {strides = array<i32>} : memref<9x8x32xf32, #tpu.memory_space<vmem>>, vector<1x8x32xf32>,
    %206 = vector.extract_strided_slice %13 {offsets = [4, 0, 0], sizes = [1, 8, 128], strides = [1, 1, 1]} : vector<9x8x128xf32> to vector<1x8x128xf32>
    %207 = vector.shape_cast %206 : vector<1x8x128xf32> to vector<8x128xf32>
    %cst_63 = arith.constant dense<0.000000e+00> : vector<8x128xf32>
    %208 = tpu.matmul %180, %2, %cst_63 {dimension_numbers = #tpu.dot_dimension_numbers<[1], [0], [0], [1], [0, 0, 1, 1], [], []>} : vector<8x32xf32>, vector<32x128xf32>, vector<8x128xf32> -> vector<8x128xf32>
    %209 = arith.addf %207, %208 : vector<8x128xf32>
    %210 = arith.negf %209 : vector<8x128xf32>
    %211 = math.exp %210 : vector<8x128xf32>
    %cst_64 = arith.constant 1.000000e+00 : f32
    %212 = vector.broadcast %cst_64 : f32 to vector<8x128xf32>
    %213 = arith.addf %212, %211 : vector<8x128xf32>
    %214 = arith.divf %212, %213 : vector<8x128xf32>
    %215 = vector.extract_strided_slice %214 {offsets = [0, 0], sizes = [8, 32], strides = [1, 1]} : vector<8x128xf32> to vector<8x32xf32>
    %216 = vector.extract_strided_slice %214 {offsets = [0, 32], sizes = [8, 32], strides = [1, 1]} : vector<8x128xf32> to vector<8x32xf32>
    %217 = vector.extract_strided_slice %214 {offsets = [0, 64], sizes = [8, 32], strides = [1, 1]} : vector<8x128xf32> to vector<8x32xf32>
    %cst_65 = arith.constant 2.000000e+00 : f32
    %218 = vector.broadcast %cst_65 : f32 to vector<8x32xf32>
    %219 = arith.mulf %218, %217 : vector<8x32xf32>
    %cst_66 = arith.constant 1.000000e+00 : f32
    %220 = vector.broadcast %cst_66 : f32 to vector<8x32xf32>
    %221 = arith.subf %219, %220 : vector<8x32xf32>
    %222 = vector.extract_strided_slice %214 {offsets = [0, 96], sizes = [8, 32], strides = [1, 1]} : vector<8x128xf32> to vector<8x32xf32>
    %223 = arith.mulf %216, %178 : vector<8x32xf32>
    %224 = arith.mulf %215, %221 : vector<8x32xf32>
    %225 = arith.addf %223, %224 : vector<8x32xf32>
    %226 = math.tanh %225 : vector<8x32xf32>
    %227 = arith.mulf %222, %226 : vector<8x32xf32>
    %cst_67 = arith.constant dense<0.000000e+00> : vector<8x128xf32>
    %228 = tpu.matmul %227, %1, %cst_67 {dimension_numbers = #tpu.dot_dimension_numbers<[1], [0], [0], [1], [0, 0, 1, 1], [], []>} : vector<8x32xf32>, vector<32x128xf32>, vector<8x128xf32> -> vector<8x128xf32>
    %229 = arith.addf %228, %6 : vector<8x128xf32>
    %cst_68 = arith.constant dense<0.000000e+00> : vector<8x128xf32>
    %230 = tpu.matmul %202, %3, %cst_68 {dimension_numbers = #tpu.dot_dimension_numbers<[1], [0], [0], [1], [0, 0, 1, 1], [], []>} : vector<8x32xf32>, vector<32x128xf32>, vector<8x128xf32> -> vector<8x128xf32>
    %231 = arith.addf %229, %230 : vector<8x128xf32>
    %232 = arith.negf %231 : vector<8x128xf32>
    %233 = math.exp %232 : vector<8x128xf32>
    %cst_69 = arith.constant 1.000000e+00 : f32
    %234 = vector.broadcast %cst_69 : f32 to vector<8x128xf32>
    %235 = arith.addf %234, %233 : vector<8x128xf32>
    %236 = arith.divf %234, %235 : vector<8x128xf32>
    %237 = vector.extract_strided_slice %236 {offsets = [0, 0], sizes = [8, 32], strides = [1, 1]} : vector<8x128xf32> to vector<8x32xf32>
    %238 = vector.extract_strided_slice %236 {offsets = [0, 32], sizes = [8, 32], strides = [1, 1]} : vector<8x128xf32> to vector<8x32xf32>
    %239 = vector.extract_strided_slice %236 {offsets = [0, 64], sizes = [8, 32], strides = [1, 1]} : vector<8x128xf32> to vector<8x32xf32>
    %cst_70 = arith.constant 2.000000e+00 : f32
    %240 = vector.broadcast %cst_70 : f32 to vector<8x32xf32>
    %241 = arith.mulf %240, %239 : vector<8x32xf32>
    %cst_71 = arith.constant 1.000000e+00 : f32
    %242 = vector.broadcast %cst_71 : f32 to vector<8x32xf32>
    %243 = arith.subf %241, %242 : vector<8x32xf32>
    %244 = vector.extract_strided_slice %236 {offsets = [0, 96], sizes = [8, 32], strides = [1, 1]} : vector<8x128xf32> to vector<8x32xf32>
    %245 = arith.mulf %238, %200 : vector<8x32xf32>
    %246 = arith.mulf %237, %243 : vector<8x32xf32>
    %247 = arith.addf %245, %246 : vector<8x32xf32>
    %248 = math.tanh %247 : vector<8x32xf32>
    %249 = arith.mulf %244, %248 : vector<8x32xf32>
    %c4 = arith.constant 4 : index
    %c0_72 = arith.constant 0 : index
    %c0_73 = arith.constant 0 : index
    %250 = vector.load %arg8[%c4, %c0_72, %c0_73] : memref<9x8x32xf32, #tpu.memory_space<vmem>>, vector<1x8x32xf32>
    %251 = vector.shape_cast %250 : vector<1x8x32xf32> to vector<8x32xf32>
    %252 = vector.shape_cast %249 : vector<8x32xf32> to vector<1x8x32xf32>
    tpu.vector_store %arg8[%c4, %c0_72, %c0_73], %252 {strides = array<i32>} : memref<9x8x32xf32, #tpu.memory_space<vmem>>, vector<1x8x32xf32>,
    %253 = vector.extract_strided_slice %13 {offsets = [5, 0, 0], sizes = [1, 8, 128], strides = [1, 1, 1]} : vector<9x8x128xf32> to vector<1x8x128xf32>
    %254 = vector.shape_cast %253 : vector<1x8x128xf32> to vector<8x128xf32>
    %cst_74 = arith.constant dense<0.000000e+00> : vector<8x128xf32>
    %255 = tpu.matmul %227, %2, %cst_74 {dimension_numbers = #tpu.dot_dimension_numbers<[1], [0], [0], [1], [0, 0, 1, 1], [], []>} : vector<8x32xf32>, vector<32x128xf32>, vector<8x128xf32> -> vector<8x128xf32>
    %256 = arith.addf %254, %255 : vector<8x128xf32>
    %257 = arith.negf %256 : vector<8x128xf32>
    %258 = math.exp %257 : vector<8x128xf32>
    %cst_75 = arith.constant 1.000000e+00 : f32
    %259 = vector.broadcast %cst_75 : f32 to vector<8x128xf32>
    %260 = arith.addf %259, %258 : vector<8x128xf32>
    %261 = arith.divf %259, %260 : vector<8x128xf32>
    %262 = vector.extract_strided_slice %261 {offsets = [0, 0], sizes = [8, 32], strides = [1, 1]} : vector<8x128xf32> to vector<8x32xf32>
    %263 = vector.extract_strided_slice %261 {offsets = [0, 32], sizes = [8, 32], strides = [1, 1]} : vector<8x128xf32> to vector<8x32xf32>
    %264 = vector.extract_strided_slice %261 {offsets = [0, 64], sizes = [8, 32], strides = [1, 1]} : vector<8x128xf32> to vector<8x32xf32>
    %cst_76 = arith.constant 2.000000e+00 : f32
    %265 = vector.broadcast %cst_76 : f32 to vector<8x32xf32>
    %266 = arith.mulf %265, %264 : vector<8x32xf32>
    %cst_77 = arith.constant 1.000000e+00 : f32
    %267 = vector.broadcast %cst_77 : f32 to vector<8x32xf32>
    %268 = arith.subf %266, %267 : vector<8x32xf32>
    %269 = vector.extract_strided_slice %261 {offsets = [0, 96], sizes = [8, 32], strides = [1, 1]} : vector<8x128xf32> to vector<8x32xf32>
    %270 = arith.mulf %263, %225 : vector<8x32xf32>
    %271 = arith.mulf %262, %268 : vector<8x32xf32>
    %272 = arith.addf %270, %271 : vector<8x32xf32>
    %273 = math.tanh %272 : vector<8x32xf32>
    %274 = arith.mulf %269, %273 : vector<8x32xf32>
    %cst_78 = arith.constant dense<0.000000e+00> : vector<8x128xf32>
    %275 = tpu.matmul %274, %1, %cst_78 {dimension_numbers = #tpu.dot_dimension_numbers<[1], [0], [0], [1], [0, 0, 1, 1], [], []>} : vector<8x32xf32>, vector<32x128xf32>, vector<8x128xf32> -> vector<8x128xf32>
    %276 = arith.addf %275, %6 : vector<8x128xf32>
    %cst_79 = arith.constant dense<0.000000e+00> : vector<8x128xf32>
    %277 = tpu.matmul %249, %3, %cst_79 {dimension_numbers = #tpu.dot_dimension_numbers<[1], [0], [0], [1], [0, 0, 1, 1], [], []>} : vector<8x32xf32>, vector<32x128xf32>, vector<8x128xf32> -> vector<8x128xf32>
    %278 = arith.addf %276, %277 : vector<8x128xf32>
    %279 = arith.negf %278 : vector<8x128xf32>
    %280 = math.exp %279 : vector<8x128xf32>
    %cst_80 = arith.constant 1.000000e+00 : f32
    %281 = vector.broadcast %cst_80 : f32 to vector<8x128xf32>
    %282 = arith.addf %281, %280 : vector<8x128xf32>
    %283 = arith.divf %281, %282 : vector<8x128xf32>
    %284 = vector.extract_strided_slice %283 {offsets = [0, 0], sizes = [8, 32], strides = [1, 1]} : vector<8x128xf32> to vector<8x32xf32>
    %285 = vector.extract_strided_slice %283 {offsets = [0, 32], sizes = [8, 32], strides = [1, 1]} : vector<8x128xf32> to vector<8x32xf32>
    %286 = vector.extract_strided_slice %283 {offsets = [0, 64], sizes = [8, 32], strides = [1, 1]} : vector<8x128xf32> to vector<8x32xf32>
    %cst_81 = arith.constant 2.000000e+00 : f32
    %287 = vector.broadcast %cst_81 : f32 to vector<8x32xf32>
    %288 = arith.mulf %287, %286 : vector<8x32xf32>
    %cst_82 = arith.constant 1.000000e+00 : f32
    %289 = vector.broadcast %cst_82 : f32 to vector<8x32xf32>
    %290 = arith.subf %288, %289 : vector<8x32xf32>
    %291 = vector.extract_strided_slice %283 {offsets = [0, 96], sizes = [8, 32], strides = [1, 1]} : vector<8x128xf32> to vector<8x32xf32>
    %292 = arith.mulf %285, %247 : vector<8x32xf32>
    %293 = arith.mulf %284, %290 : vector<8x32xf32>
    %294 = arith.addf %292, %293 : vector<8x32xf32>
    %295 = math.tanh %294 : vector<8x32xf32>
    %296 = arith.mulf %291, %295 : vector<8x32xf32>
    %c5 = arith.constant 5 : index
    %c0_83 = arith.constant 0 : index
    %c0_84 = arith.constant 0 : index
    %297 = vector.load %arg8[%c5, %c0_83, %c0_84] : memref<9x8x32xf32, #tpu.memory_space<vmem>>, vector<1x8x32xf32>
    %298 = vector.shape_cast %297 : vector<1x8x32xf32> to vector<8x32xf32>
    %299 = vector.shape_cast %296 : vector<8x32xf32> to vector<1x8x32xf32>
    tpu.vector_store %arg8[%c5, %c0_83, %c0_84], %299 {strides = array<i32>} : memref<9x8x32xf32, #tpu.memory_space<vmem>>, vector<1x8x32xf32>,
    %300 = vector.extract_strided_slice %13 {offsets = [6, 0, 0], sizes = [1, 8, 128], strides = [1, 1, 1]} : vector<9x8x128xf32> to vector<1x8x128xf32>
    %301 = vector.shape_cast %300 : vector<1x8x128xf32> to vector<8x128xf32>
    %cst_85 = arith.constant dense<0.000000e+00> : vector<8x128xf32>
    %302 = tpu.matmul %274, %2, %cst_85 {dimension_numbers = #tpu.dot_dimension_numbers<[1], [0], [0], [1], [0, 0, 1, 1], [], []>} : vector<8x32xf32>, vector<32x128xf32>, vector<8x128xf32> -> vector<8x128xf32>
    %303 = arith.addf %301, %302 : vector<8x128xf32>
    %304 = arith.negf %303 : vector<8x128xf32>
    %305 = math.exp %304 : vector<8x128xf32>
    %cst_86 = arith.constant 1.000000e+00 : f32
    %306 = vector.broadcast %cst_86 : f32 to vector<8x128xf32>
    %307 = arith.addf %306, %305 : vector<8x128xf32>
    %308 = arith.divf %306, %307 : vector<8x128xf32>
    %309 = vector.extract_strided_slice %308 {offsets = [0, 0], sizes = [8, 32], strides = [1, 1]} : vector<8x128xf32> to vector<8x32xf32>
    %310 = vector.extract_strided_slice %308 {offsets = [0, 32], sizes = [8, 32], strides = [1, 1]} : vector<8x128xf32> to vector<8x32xf32>
    %311 = vector.extract_strided_slice %308 {offsets = [0, 64], sizes = [8, 32], strides = [1, 1]} : vector<8x128xf32> to vector<8x32xf32>
    %cst_87 = arith.constant 2.000000e+00 : f32
    %312 = vector.broadcast %cst_87 : f32 to vector<8x32xf32>
    %313 = arith.mulf %312, %311 : vector<8x32xf32>
    %cst_88 = arith.constant 1.000000e+00 : f32
    %314 = vector.broadcast %cst_88 : f32 to vector<8x32xf32>
    %315 = arith.subf %313, %314 : vector<8x32xf32>
    %316 = vector.extract_strided_slice %308 {offsets = [0, 96], sizes = [8, 32], strides = [1, 1]} : vector<8x128xf32> to vector<8x32xf32>
    %317 = arith.mulf %310, %272 : vector<8x32xf32>
    %318 = arith.mulf %309, %315 : vector<8x32xf32>
    %319 = arith.addf %317, %318 : vector<8x32xf32>
    %320 = math.tanh %319 : vector<8x32xf32>
    %321 = arith.mulf %316, %320 : vector<8x32xf32>
    %cst_89 = arith.constant dense<0.000000e+00> : vector<8x128xf32>
    %322 = tpu.matmul %321, %1, %cst_89 {dimension_numbers = #tpu.dot_dimension_numbers<[1], [0], [0], [1], [0, 0, 1, 1], [], []>} : vector<8x32xf32>, vector<32x128xf32>, vector<8x128xf32> -> vector<8x128xf32>
    %323 = arith.addf %322, %6 : vector<8x128xf32>
    %cst_90 = arith.constant dense<0.000000e+00> : vector<8x128xf32>
    %324 = tpu.matmul %296, %3, %cst_90 {dimension_numbers = #tpu.dot_dimension_numbers<[1], [0], [0], [1], [0, 0, 1, 1], [], []>} : vector<8x32xf32>, vector<32x128xf32>, vector<8x128xf32> -> vector<8x128xf32>
    %325 = arith.addf %323, %324 : vector<8x128xf32>
    %326 = arith.negf %325 : vector<8x128xf32>
    %327 = math.exp %326 : vector<8x128xf32>
    %cst_91 = arith.constant 1.000000e+00 : f32
    %328 = vector.broadcast %cst_91 : f32 to vector<8x128xf32>
    %329 = arith.addf %328, %327 : vector<8x128xf32>
    %330 = arith.divf %328, %329 : vector<8x128xf32>
    %331 = vector.extract_strided_slice %330 {offsets = [0, 0], sizes = [8, 32], strides = [1, 1]} : vector<8x128xf32> to vector<8x32xf32>
    %332 = vector.extract_strided_slice %330 {offsets = [0, 32], sizes = [8, 32], strides = [1, 1]} : vector<8x128xf32> to vector<8x32xf32>
    %333 = vector.extract_strided_slice %330 {offsets = [0, 64], sizes = [8, 32], strides = [1, 1]} : vector<8x128xf32> to vector<8x32xf32>
    %cst_92 = arith.constant 2.000000e+00 : f32
    %334 = vector.broadcast %cst_92 : f32 to vector<8x32xf32>
    %335 = arith.mulf %334, %333 : vector<8x32xf32>
    %cst_93 = arith.constant 1.000000e+00 : f32
    %336 = vector.broadcast %cst_93 : f32 to vector<8x32xf32>
    %337 = arith.subf %335, %336 : vector<8x32xf32>
    %338 = vector.extract_strided_slice %330 {offsets = [0, 96], sizes = [8, 32], strides = [1, 1]} : vector<8x128xf32> to vector<8x32xf32>
    %339 = arith.mulf %332, %294 : vector<8x32xf32>
    %340 = arith.mulf %331, %337 : vector<8x32xf32>
    %341 = arith.addf %339, %340 : vector<8x32xf32>
    %342 = math.tanh %341 : vector<8x32xf32>
    %343 = arith.mulf %338, %342 : vector<8x32xf32>
    %c6 = arith.constant 6 : index
    %c0_94 = arith.constant 0 : index
    %c0_95 = arith.constant 0 : index
    %344 = vector.load %arg8[%c6, %c0_94, %c0_95] : memref<9x8x32xf32, #tpu.memory_space<vmem>>, vector<1x8x32xf32>
    %345 = vector.shape_cast %344 : vector<1x8x32xf32> to vector<8x32xf32>
    %346 = vector.shape_cast %343 : vector<8x32xf32> to vector<1x8x32xf32>
    tpu.vector_store %arg8[%c6, %c0_94, %c0_95], %346 {strides = array<i32>} : memref<9x8x32xf32, #tpu.memory_space<vmem>>, vector<1x8x32xf32>,
    %347 = vector.extract_strided_slice %13 {offsets = [7, 0, 0], sizes = [1, 8, 128], strides = [1, 1, 1]} : vector<9x8x128xf32> to vector<1x8x128xf32>
    %348 = vector.shape_cast %347 : vector<1x8x128xf32> to vector<8x128xf32>
    %cst_96 = arith.constant dense<0.000000e+00> : vector<8x128xf32>
    %349 = tpu.matmul %321, %2, %cst_96 {dimension_numbers = #tpu.dot_dimension_numbers<[1], [0], [0], [1], [0, 0, 1, 1], [], []>} : vector<8x32xf32>, vector<32x128xf32>, vector<8x128xf32> -> vector<8x128xf32>
    %350 = arith.addf %348, %349 : vector<8x128xf32>
    %351 = arith.negf %350 : vector<8x128xf32>
    %352 = math.exp %351 : vector<8x128xf32>
    %cst_97 = arith.constant 1.000000e+00 : f32
    %353 = vector.broadcast %cst_97 : f32 to vector<8x128xf32>
    %354 = arith.addf %353, %352 : vector<8x128xf32>
    %355 = arith.divf %353, %354 : vector<8x128xf32>
    %356 = vector.extract_strided_slice %355 {offsets = [0, 0], sizes = [8, 32], strides = [1, 1]} : vector<8x128xf32> to vector<8x32xf32>
    %357 = vector.extract_strided_slice %355 {offsets = [0, 32], sizes = [8, 32], strides = [1, 1]} : vector<8x128xf32> to vector<8x32xf32>
    %358 = vector.extract_strided_slice %355 {offsets = [0, 64], sizes = [8, 32], strides = [1, 1]} : vector<8x128xf32> to vector<8x32xf32>
    %cst_98 = arith.constant 2.000000e+00 : f32
    %359 = vector.broadcast %cst_98 : f32 to vector<8x32xf32>
    %360 = arith.mulf %359, %358 : vector<8x32xf32>
    %cst_99 = arith.constant 1.000000e+00 : f32
    %361 = vector.broadcast %cst_99 : f32 to vector<8x32xf32>
    %362 = arith.subf %360, %361 : vector<8x32xf32>
    %363 = vector.extract_strided_slice %355 {offsets = [0, 96], sizes = [8, 32], strides = [1, 1]} : vector<8x128xf32> to vector<8x32xf32>
    %364 = arith.mulf %357, %319 : vector<8x32xf32>
    %365 = arith.mulf %356, %362 : vector<8x32xf32>
    %366 = arith.addf %364, %365 : vector<8x32xf32>
    %367 = math.tanh %366 : vector<8x32xf32>
    %368 = arith.mulf %363, %367 : vector<8x32xf32>
    %cst_100 = arith.constant dense<0.000000e+00> : vector<8x128xf32>
    %369 = tpu.matmul %368, %1, %cst_100 {dimension_numbers = #tpu.dot_dimension_numbers<[1], [0], [0], [1], [0, 0, 1, 1], [], []>} : vector<8x32xf32>, vector<32x128xf32>, vector<8x128xf32> -> vector<8x128xf32>
    %370 = arith.addf %369, %6 : vector<8x128xf32>
    %cst_101 = arith.constant dense<0.000000e+00> : vector<8x128xf32>
    %371 = tpu.matmul %343, %3, %cst_101 {dimension_numbers = #tpu.dot_dimension_numbers<[1], [0], [0], [1], [0, 0, 1, 1], [], []>} : vector<8x32xf32>, vector<32x128xf32>, vector<8x128xf32> -> vector<8x128xf32>
    %372 = arith.addf %370, %371 : vector<8x128xf32>
    %373 = arith.negf %372 : vector<8x128xf32>
    %374 = math.exp %373 : vector<8x128xf32>
    %cst_102 = arith.constant 1.000000e+00 : f32
    %375 = vector.broadcast %cst_102 : f32 to vector<8x128xf32>
    %376 = arith.addf %375, %374 : vector<8x128xf32>
    %377 = arith.divf %375, %376 : vector<8x128xf32>
    %378 = vector.extract_strided_slice %377 {offsets = [0, 0], sizes = [8, 32], strides = [1, 1]} : vector<8x128xf32> to vector<8x32xf32>
    %379 = vector.extract_strided_slice %377 {offsets = [0, 32], sizes = [8, 32], strides = [1, 1]} : vector<8x128xf32> to vector<8x32xf32>
    %380 = vector.extract_strided_slice %377 {offsets = [0, 64], sizes = [8, 32], strides = [1, 1]} : vector<8x128xf32> to vector<8x32xf32>
    %cst_103 = arith.constant 2.000000e+00 : f32
    %381 = vector.broadcast %cst_103 : f32 to vector<8x32xf32>
    %382 = arith.mulf %381, %380 : vector<8x32xf32>
    %cst_104 = arith.constant 1.000000e+00 : f32
    %383 = vector.broadcast %cst_104 : f32 to vector<8x32xf32>
    %384 = arith.subf %382, %383 : vector<8x32xf32>
    %385 = vector.extract_strided_slice %377 {offsets = [0, 96], sizes = [8, 32], strides = [1, 1]} : vector<8x128xf32> to vector<8x32xf32>
    %386 = arith.mulf %379, %341 : vector<8x32xf32>
    %387 = arith.mulf %378, %384 : vector<8x32xf32>
    %388 = arith.addf %386, %387 : vector<8x32xf32>
    %389 = math.tanh %388 : vector<8x32xf32>
    %390 = arith.mulf %385, %389 : vector<8x32xf32>
    %c7 = arith.constant 7 : index
    %c0_105 = arith.constant 0 : index
    %c0_106 = arith.constant 0 : index
    %391 = vector.load %arg8[%c7, %c0_105, %c0_106] : memref<9x8x32xf32, #tpu.memory_space<vmem>>, vector<1x8x32xf32>
    %392 = vector.shape_cast %391 : vector<1x8x32xf32> to vector<8x32xf32>
    %393 = vector.shape_cast %390 : vector<8x32xf32> to vector<1x8x32xf32>
    tpu.vector_store %arg8[%c7, %c0_105, %c0_106], %393 {strides = array<i32>} : memref<9x8x32xf32, #tpu.memory_space<vmem>>, vector<1x8x32xf32>,
    %394 = vector.extract_strided_slice %13 {offsets = [8, 0, 0], sizes = [1, 8, 128], strides = [1, 1, 1]} : vector<9x8x128xf32> to vector<1x8x128xf32>
    %395 = vector.shape_cast %394 : vector<1x8x128xf32> to vector<8x128xf32>
    %cst_107 = arith.constant dense<0.000000e+00> : vector<8x128xf32>
    %396 = tpu.matmul %368, %2, %cst_107 {dimension_numbers = #tpu.dot_dimension_numbers<[1], [0], [0], [1], [0, 0, 1, 1], [], []>} : vector<8x32xf32>, vector<32x128xf32>, vector<8x128xf32> -> vector<8x128xf32>
    %397 = arith.addf %395, %396 : vector<8x128xf32>
    %398 = arith.negf %397 : vector<8x128xf32>
    %399 = math.exp %398 : vector<8x128xf32>
    %cst_108 = arith.constant 1.000000e+00 : f32
    %400 = vector.broadcast %cst_108 : f32 to vector<8x128xf32>
    %401 = arith.addf %400, %399 : vector<8x128xf32>
    %402 = arith.divf %400, %401 : vector<8x128xf32>
    %403 = vector.extract_strided_slice %402 {offsets = [0, 0], sizes = [8, 32], strides = [1, 1]} : vector<8x128xf32> to vector<8x32xf32>
    %404 = vector.extract_strided_slice %402 {offsets = [0, 32], sizes = [8, 32], strides = [1, 1]} : vector<8x128xf32> to vector<8x32xf32>
    %405 = vector.extract_strided_slice %402 {offsets = [0, 64], sizes = [8, 32], strides = [1, 1]} : vector<8x128xf32> to vector<8x32xf32>
    %cst_109 = arith.constant 2.000000e+00 : f32
    %406 = vector.broadcast %cst_109 : f32 to vector<8x32xf32>
    %407 = arith.mulf %406, %405 : vector<8x32xf32>
    %cst_110 = arith.constant 1.000000e+00 : f32
    %408 = vector.broadcast %cst_110 : f32 to vector<8x32xf32>
    %409 = arith.subf %407, %408 : vector<8x32xf32>
    %410 = vector.extract_strided_slice %402 {offsets = [0, 96], sizes = [8, 32], strides = [1, 1]} : vector<8x128xf32> to vector<8x32xf32>
    %411 = arith.mulf %404, %366 : vector<8x32xf32>
    %412 = arith.mulf %403, %409 : vector<8x32xf32>
    %413 = arith.addf %411, %412 : vector<8x32xf32>
    %414 = math.tanh %413 : vector<8x32xf32>
    %415 = arith.mulf %410, %414 : vector<8x32xf32>
    %cst_111 = arith.constant dense<0.000000e+00> : vector<8x128xf32>
    %416 = tpu.matmul %415, %1, %cst_111 {dimension_numbers = #tpu.dot_dimension_numbers<[1], [0], [0], [1], [0, 0, 1, 1], [], []>} : vector<8x32xf32>, vector<32x128xf32>, vector<8x128xf32> -> vector<8x128xf32>
    %417 = arith.addf %416, %6 : vector<8x128xf32>
    %cst_112 = arith.constant dense<0.000000e+00> : vector<8x128xf32>
    %418 = tpu.matmul %390, %3, %cst_112 {dimension_numbers = #tpu.dot_dimension_numbers<[1], [0], [0], [1], [0, 0, 1, 1], [], []>} : vector<8x32xf32>, vector<32x128xf32>, vector<8x128xf32> -> vector<8x128xf32>
    %419 = arith.addf %417, %418 : vector<8x128xf32>
    %420 = arith.negf %419 : vector<8x128xf32>
    %421 = math.exp %420 : vector<8x128xf32>
    %cst_113 = arith.constant 1.000000e+00 : f32
    %422 = vector.broadcast %cst_113 : f32 to vector<8x128xf32>
    %423 = arith.addf %422, %421 : vector<8x128xf32>
    %424 = arith.divf %422, %423 : vector<8x128xf32>
    %425 = vector.extract_strided_slice %424 {offsets = [0, 0], sizes = [8, 32], strides = [1, 1]} : vector<8x128xf32> to vector<8x32xf32>
    %426 = vector.extract_strided_slice %424 {offsets = [0, 32], sizes = [8, 32], strides = [1, 1]} : vector<8x128xf32> to vector<8x32xf32>
    %427 = vector.extract_strided_slice %424 {offsets = [0, 64], sizes = [8, 32], strides = [1, 1]} : vector<8x128xf32> to vector<8x32xf32>
    %cst_114 = arith.constant 2.000000e+00 : f32
    %428 = vector.broadcast %cst_114 : f32 to vector<8x32xf32>
    %429 = arith.mulf %428, %427 : vector<8x32xf32>
    %cst_115 = arith.constant 1.000000e+00 : f32
    %430 = vector.broadcast %cst_115 : f32 to vector<8x32xf32>
    %431 = arith.subf %429, %430 : vector<8x32xf32>
    %432 = vector.extract_strided_slice %424 {offsets = [0, 96], sizes = [8, 32], strides = [1, 1]} : vector<8x128xf32> to vector<8x32xf32>
    %433 = arith.mulf %426, %388 : vector<8x32xf32>
    %434 = arith.mulf %425, %431 : vector<8x32xf32>
    %435 = arith.addf %433, %434 : vector<8x32xf32>
    %436 = math.tanh %435 : vector<8x32xf32>
    %437 = arith.mulf %432, %436 : vector<8x32xf32>
    %c8 = arith.constant 8 : index
    %c0_116 = arith.constant 0 : index
    %c0_117 = arith.constant 0 : index
    %438 = vector.load %arg8[%c8, %c0_116, %c0_117] : memref<9x8x32xf32, #tpu.memory_space<vmem>>, vector<1x8x32xf32>
    %439 = vector.shape_cast %438 : vector<1x8x32xf32> to vector<8x32xf32>
    %440 = vector.shape_cast %437 : vector<8x32xf32> to vector<1x8x32xf32>
    tpu.vector_store %arg8[%c8, %c0_116, %c0_117], %440 {strides = array<i32>} : memref<9x8x32xf32, #tpu.memory_space<vmem>>, vector<1x8x32xf32>,
    return
  }
  func.func @transform_0(%arg0: i32) -> (i32, i32, i32) {
    %c0_i32 = arith.constant 0 : i32
    %c0_i32_0 = arith.constant 0 : i32
    %c0_i32_1 = arith.constant 0 : i32
    return %c0_i32, %arg0, %c0_i32_0 : i32, i32, i32
  }
  func.func @transform_1(%arg0: i32) -> (i32, i32) {
    %c0_i32 = arith.constant 0 : i32
    %c0_i32_0 = arith.constant 0 : i32
    %c0_i32_1 = arith.constant 0 : i32
    return %c0_i32, %c0_i32_0 : i32, i32
  }
  func.func @transform_2(%arg0: i32) -> (i32, i32) {
    %c0_i32 = arith.constant 0 : i32
    %c0_i32_0 = arith.constant 0 : i32
    %c0_i32_1 = arith.constant 0 : i32
    return %c0_i32, %c0_i32_0 : i32, i32
  }
  func.func @transform_3(%arg0: i32) -> (i32, i32) {
    %c0_i32 = arith.constant 0 : i32
    %c0_i32_0 = arith.constant 0 : i32
    %c0_i32_1 = arith.constant 0 : i32
    return %c0_i32, %c0_i32_0 : i32, i32
  }
  func.func @transform_4(%arg0: i32) -> (i32, i32) {
    %c0_i32 = arith.constant 0 : i32
    %c0_i32_0 = arith.constant 0 : i32
    %c0_i32_1 = arith.constant 0 : i32
    return %c0_i32, %c0_i32_0 : i32, i32
  }
  func.func @transform_5(%arg0: i32) -> (i32, i32) {
    %c0_i32 = arith.constant 0 : i32
    %c0_i32_0 = arith.constant 0 : i32
    %c0_i32_1 = arith.constant 0 : i32
    return %c0_i32, %c0_i32_0 : i32, i32
  }
  func.func @transform_6(%arg0: i32) -> (i32, i32) {
    %c0_i32 = arith.constant 0 : i32
    %c0_i32_0 = arith.constant 0 : i32
    %c0_i32_1 = arith.constant 0 : i32
    return %c0_i32, %c0_i32_0 : i32, i32
  }
  func.func @transform_7(%arg0: i32) -> (i32, i32, i32) {
    %c0_i32 = arith.constant 0 : i32
    %c0_i32_0 = arith.constant 0 : i32
    %c0_i32_1 = arith.constant 0 : i32
    return %c0_i32, %arg0, %c0_i32_0 : i32, i32, i32
  }
}

</mosaic_0001>

<llo_original>
// kernel: tpu_custom_call.1
$region0: #{tpu_custom_call.1}
  #allocation0 [shape = 'u32[]', space=smem, size = 0x4, offset = 0x4, fixed_abs, tag = 'smem constant byte address 0x4 - core index']
  #allocation1 [shape = 'u32[72,128]{1,0:T(1,128)}', space=vmem, size = 0x9000, scoped, tag = 'internal scratch']
  %s0 = inlined_call_operand.hbm [shape: f32[9,8,32], index: 0, kind: input, shape index: {}]
  %s1 = inlined_call_operand.hbm [shape: f32[32,128], index: 1, kind: input, shape index: {}]
  %s2 = inlined_call_operand.hbm [shape: f32[32,128], index: 2, kind: input, shape index: {}]
  %s3 = inlined_call_operand.vmem [shape: f32[1,128], index: 3, kind: input, shape index: {}]
  %s4 = inlined_call_operand.hbm [shape: f32[32,128], index: 4, kind: input, shape index: {}]
  %s5 = inlined_call_operand.hbm [shape: f32[32,128], index: 5, kind: input, shape index: {}]
  %s6 = inlined_call_operand.vmem [shape: f32[1,128], index: 6, kind: input, shape index: {}]
  %s7 = inlined_call_operand.hbm [shape: f32[9,8,32], index: 7, kind: output, shape index: {}]
  %s8 = sld [smem:[#allocation0]]
  $region58: #{tpu_custom_call.1} parent=0
    _
  %s10 = ssub.s32 1, %s8
  %s11 = scalar_select 0, %s10, %s8
  $region1: #{tpu_custom_call.1} parent=0
    #allocation2 [shape = 'u8[36864]{0}', space=vmem, size = 0x9000, scoped, tag = 'input window, operand 0, single buffered']
    #allocation3 [shape = 's32[1]{0}', space=sflag, size = 0x4, scoped, tag = 'scoped memory for tpu_custom_call.1']
    #allocation4 [shape = 's32[1]{0}', space=sflag, size = 0x4, scoped, tag = 'scoped memory for tpu_custom_call.1']
    #allocation5 [shape = 'u8[16384]{0}', space=vmem, size = 0x4000, scoped, tag = 'input window, operand 1, single buffered']
    #allocation6 [shape = 's32[1]{0}', space=sflag, size = 0x4, scoped, tag = 'scoped memory for tpu_custom_call.1']
    #allocation7 [shape = 'u8[16384]{0}', space=vmem, size = 0x4000, scoped, tag = 'input window, operand 2, single buffered']
    #allocation8 [shape = 'u8[16384]{0}', space=vmem, size = 0x4000, scoped, tag = 'input window, operand 4, single buffered']
    #allocation9 [shape = 's32[1]{0}', space=sflag, size = 0x4, scoped, tag = 'scoped memory for tpu_custom_call.1']
    #allocation10 [shape = 'u8[16384]{0}', space=vmem, size = 0x4000, scoped, tag = 'input window, operand 5, single buffered']
    #allocation11 [shape = 'u8[36864]{0}', space=vmem, size = 0x9000, scoped, tag = 'output window, operand 0, single buffered']
    %12 = vsyncpa [#allocation3], 0
    %13 = vsyncpa [#allocation6], 0
    %14 = vsyncpa [#allocation9], 0
    %15 = vsyncpa [#allocation4], 0
    // Predicated region
    $region2: #{tpu_custom_call.1} parent=1 // pred_check
      _
    $region3: #{tpu_custom_call.1} parent=1 // pred_check_branch
      %17 = sbr.rel (0) target = $region5
    $region4: #{tpu_custom_call.1} parent=1 // pred_region
      %19 = vsyncadd [#allocation3], 0
      %s20 = sshll.u32 %s0, 4
      %s21 = int_to_ptr.hbm [resolvable:$true] %s20
      %s22 = sshll.u32 [#allocation2], 4
      %s23 = int_to_ptr.vmem [resolvable:$true] %s22
      %28 = dma.hbm_to_vmem [thread:$0]  %s21, 1152, %s23, [#allocation3], 128, 128, 8
    $region5: #{tpu_custom_call.1} parent=1 // pred_fallthru
      _
    // Predicated region
    $region6: #{tpu_custom_call.1} parent=1 // pred_check
      _
    $region7: #{tpu_custom_call.1} parent=1 // pred_check_branch
      %30 = sbr.rel (0) target = $region9
    $region8: #{tpu_custom_call.1} parent=1 // pred_region
      %32 = vsyncadd [#allocation6], 0
      %s33 = sshll.u32 %s1, 4
      %s34 = int_to_ptr.hbm [resolvable:$true] %s33
      %s35 = sshll.u32 [#allocation5], 4
      %s36 = int_to_ptr.vmem [resolvable:$true] %s35
      %41 = dma.hbm_to_vmem [thread:$0]  %s34, 512, %s36, [#allocation6], 128, 128, 8
    $region9: #{tpu_custom_call.1} parent=1 // pred_fallthru
      _
    // Predicated region
    $region10: #{tpu_custom_call.1} parent=1 // pred_check
      _
    $region11: #{tpu_custom_call.1} parent=1 // pred_check_branch
      %43 = sbr.rel (0) target = $region13
    $region12: #{tpu_custom_call.1} parent=1 // pred_region
      %45 = vsyncadd [#allocation6], 0
      %s46 = sshll.u32 %s2, 4
      %s47 = int_to_ptr.hbm [resolvable:$true] %s46
      %s48 = sshll.u32 [#allocation7], 4
      %s49 = int_to_ptr.vmem [resolvable:$true] %s48
      %54 = dma.hbm_to_vmem [thread:$0]  %s47, 512, %s49, [#allocation6], 128, 128, 8
    $region13: #{tpu_custom_call.1} parent=1 // pred_fallthru
      _
    // Predicated region
    $region14: #{tpu_custom_call.1} parent=1 // pred_check
      _
    $region15: #{tpu_custom_call.1} parent=1 // pred_check_branch
      %56 = sbr.rel (0) target = $region17
    $region16: #{tpu_custom_call.1} parent=1 // pred_region
      _
    $region17: #{tpu_custom_call.1} parent=1 // pred_fallthru
      _
    // Predicated region
    $region18: #{tpu_custom_call.1} parent=1 // pred_check
      _
    $region19: #{tpu_custom_call.1} parent=1 // pred_check_branch
      %58 = sbr.rel (0) target = $region21
    $region20: #{tpu_custom_call.1} parent=1 // pred_region
      %60 = vsyncadd [#allocation9], 0
      %s61 = sshll.u32 %s4, 4
      %s62 = int_to_ptr.hbm [resolvable:$true] %s61
      %s63 = sshll.u32 [#allocation8], 4
      %s64 = int_to_ptr.vmem [resolvable:$true] %s63
      %69 = dma.hbm_to_vmem [thread:$0]  %s62, 512, %s64, [#allocation9], 128, 128, 8
    $region21: #{tpu_custom_call.1} parent=1 // pred_fallthru
      _
    // Predicated region
    $region22: #{tpu_custom_call.1} parent=1 // pred_check
      _
    $region23: #{tpu_custom_call.1} parent=1 // pred_check_branch
      %71 = sbr.rel (0) target = $region25
    $region24: #{tpu_custom_call.1} parent=1 // pred_region
      %73 = vsyncadd [#allocation9], 0
      %s74 = sshll.u32 %s5, 4
      %s75 = int_to_ptr.hbm [resolvable:$true] %s74
      %s76 = sshll.u32 [#allocation10], 4
      %s77 = int_to_ptr.vmem [resolvable:$true] %s76
      %82 = dma.hbm_to_vmem [thread:$0]  %s75, 512, %s77, [#allocation9], 128, 128, 8
    $region25: #{tpu_custom_call.1} parent=1 // pred_fallthru
      _
    // Predicated region
    $region26: #{tpu_custom_call.1} parent=1 // pred_check
      _
    $region27: #{tpu_custom_call.1} parent=1 // pred_check_branch
      %84 = sbr.rel (0) target = $region29
    $region28: #{tpu_custom_call.1} parent=1 // pred_region
      _
    $region29: #{tpu_custom_call.1} parent=1 // pred_fallthru
      _
    // Predicated region
    $region30: #{tpu_custom_call.1} parent=1 // pred_check
      _
    $region31: #{tpu_custom_call.1} parent=1 // pred_check_branch
      %86 = sbr.rel (0) target = $region33
    $region32: #{tpu_custom_call.1} parent=1 // pred_region
      %88 = dma.done [#allocation3], 1152
    $region33: #{tpu_custom_call.1} parent=1 // pred_fallthru
      _
    // Predicated region
    $region34: #{tpu_custom_call.1} parent=1 // pred_check
      _
    $region35: #{tpu_custom_call.1} parent=1 // pred_check_branch
      %90 = sbr.rel (0) target = $region37
    $region36: #{tpu_custom_call.1} parent=1 // pred_region
      %92 = dma.done [#allocation6], 512
    $region37: #{tpu_custom_call.1} parent=1 // pred_fallthru
      _
    // Predicated region
    $region38: #{tpu_custom_call.1} parent=1 // pred_check
      _
    $region39: #{tpu_custom_call.1} parent=1 // pred_check_branch
      %94 = sbr.rel (0) target = $region41
    $region40: #{tpu_custom_call.1} parent=1 // pred_region
      %96 = dma.done [#allocation6], 512
    $region41: #{tpu_custom_call.1} parent=1 // pred_fallthru
      _
    // Predicated region
    $region42: #{tpu_custom_call.1} parent=1 // pred_check
      _
    $region43: #{tpu_custom_call.1} parent=1 // pred_check_branch
      %98 = sbr.rel (0) target = $region45
    $region44: #{tpu_custom_call.1} parent=1 // pred_region
      %100 = dma.done [#allocation9], 512
    $region45: #{tpu_custom_call.1} parent=1 // pred_fallthru
      _
    // Predicated region
    $region46: #{tpu_custom_call.1} parent=1 // pred_check
      _
    $region47: #{tpu_custom_call.1} parent=1 // pred_check_branch
      %102 = sbr.rel (0) target = $region49
    $region48: #{tpu_custom_call.1} parent=1 // pred_region
      %104 = dma.done [#allocation9], 512
    $region49: #{tpu_custom_call.1} parent=1 // pred_fallthru
      _
    %v105 = vld [vmem:[#allocation5] sm:$0xff]
    %v106 = vld [vmem:[#allocation5 + $0x8] sm:$0xff]
    %v107 = vld [vmem:[#allocation5 + $0x10] sm:$0xff]
    %v108 = vld [vmem:[#allocation5 + $0x18] sm:$0xff]
    %v109 = vld [vmem:[#allocation8] sm:$0xff]
    %v110 = vld [vmem:[#allocation8 + $0x8] sm:$0xff]
    %v111 = vld [vmem:[#allocation8 + $0x10] sm:$0xff]
    %v112 = vld [vmem:[#allocation8 + $0x18] sm:$0xff]
    %v113 = vld [vmem:[#allocation7] sm:$0xff]
    %v114 = vld [vmem:[#allocation7 + $0x8] sm:$0xff]
    %v115 = vld [vmem:[#allocation7 + $0x10] sm:$0xff]
    %v116 = vld [vmem:[#allocation7 + $0x18] sm:$0xff]
    %v117 = vld [vmem:[#allocation10] sm:$0xff]
    %v118 = vld [vmem:[#allocation10 + $0x8] sm:$0xff]
    %v119 = vld [vmem:[#allocation10 + $0x10] sm:$0xff]
    %v120 = vld [vmem:[#allocation10 + $0x18] sm:$0xff]
    %v121 = vld [vmem:[%s6] sm:$0x1]
    %v123 = vperm.slane %v121, 0
    %v125 = vld [vmem:[#allocation2] sm:$0xff]
    %v126 = vld [vmem:[#allocation2 + $0x8] sm:$0xff]
    %v127 = vld [vmem:[#allocation2 + $0x10] sm:$0xff]
    %v128 = vld [vmem:[#allocation2 + $0x18] sm:$0xff]
    %v129 = vld [vmem:[#allocation2 + $0x20] sm:$0xff]
    %v130 = vld [vmem:[#allocation2 + $0x28] sm:$0xff]
    %v131 = vld [vmem:[#allocation2 + $0x30] sm:$0xff]
    %v132 = vld [vmem:[#allocation2 + $0x38] sm:$0xff]
    %v133 = vld [vmem:[#allocation2 + $0x40] sm:$0xff]
    %v134 = vld [vmem:[%s3] sm:$0x1]
    %v136 = vperm.slane %v134, 0
    %vm138 = vcmask 261120
    %v140 = vsel %vm138, %v125, 0
    %v143 = vsel %vm138, %v126, 0
    %v146 = vsel %vm138, %v127, 0
    %v149 = vsel %vm138, %v128, 0
    %v152 = vsel %vm138, %v129, 0
    %v155 = vsel %vm138, %v130, 0
    %v158 = vsel %vm138, %v131, 0
    %v161 = vsel %vm138, %v132, 0
    %v164 = vsel %vm138, %v133, 0
    %166 = vmatpush.msra.mxu0 0.0
    %167 = vmatpush.msra.mxu0 0.0
    %168 = vmatpush.msra.mxu0 0.0
    %169 = vmatpush.msra.mxu0 0.0
    %170 = vmatpush.msra.mxu0 0.0
    %171 = vmatpush.msra.mxu0 0.0
    %172 = vmatpush.msra.mxu0 0.0
    %173 = vmatpush.msra.mxu0 0.0
    %174 = vmatpush.msra.mxu0 0.0
    %175 = vmatpush.msra.mxu0 0.0
    %176 = vmatpush.msra.mxu0 0.0
    %177 = vmatpush.msra.mxu0 0.0
    %178 = vmatpush.msra.mxu0 %v108
    %179 = vmatpush.msra.mxu0 %v107
    %180 = vmatpush.msra.mxu0 %v106
    %181 = vmatpush.msra.mxu0 %v105
    %182 = vmatmul.f32.gmra.mxu0 %v140
    %v183 = vpop.f32.mrf.mxu0
    %v184 = vadd.f32 %v136, %v183
    %185 = vmatmul.f32.gmra.mxu0 %v143
    %v186 = vpop.f32.mrf.mxu0
    %v187 = vadd.f32 %v136, %v186
    %188 = vmatmul.f32.gmra.mxu0 %v146
    %v189 = vpop.f32.mrf.mxu0
    %v190 = vadd.f32 %v136, %v189
    %191 = vmatmul.f32.gmra.mxu0 %v149
    %v192 = vpop.f32.mrf.mxu0
    %v193 = vadd.f32 %v136, %v192
    %194 = vmatmul.f32.gmra.mxu0 %v152
    %v195 = vpop.f32.mrf.mxu0
    %v196 = vadd.f32 %v136, %v195
    %197 = vmatmul.f32.gmra.mxu0 %v155
    %v198 = vpop.f32.mrf.mxu0
    %v199 = vadd.f32 %v136, %v198
    %200 = vmatmul.f32.gmra.mxu0 %v158
    %v201 = vpop.f32.mrf.mxu0
    %v202 = vadd.f32 %v136, %v201
    %203 = vmatmul.f32.gmra.mxu0 %v161
    %v204 = vpop.f32.mrf.mxu0
    %v205 = vadd.f32 %v136, %v204
    %206 = vmatmul.f32.gmra.mxu0 %v164
    %v207 = vpop.f32.mrf.mxu0
    %v208 = vadd.f32 %v136, %v207
    %209 = vdwg.mxu0
    %v211 = vsel %vm138, 0.0, 0
    %213 = vmatpush.msra.mxu0 0.0
    %214 = vmatpush.msra.mxu0 0.0
    %215 = vmatpush.msra.mxu0 0.0
    %216 = vmatpush.msra.mxu0 0.0
    %217 = vmatpush.msra.mxu0 0.0
    %218 = vmatpush.msra.mxu0 0.0
    %219 = vmatpush.msra.mxu0 0.0
    %220 = vmatpush.msra.mxu0 0.0
    %221 = vmatpush.msra.mxu0 0.0
    %222 = vmatpush.msra.mxu0 0.0
    %223 = vmatpush.msra.mxu0 0.0
    %224 = vmatpush.msra.mxu0 0.0
    %225 = vmatpush.msra.mxu0 %v116
    %226 = vmatpush.msra.mxu0 %v115
    %227 = vmatpush.msra.mxu0 %v114
    %228 = vmatpush.msra.mxu0 %v113
    %229 = vmatmul.f32.gmra.mxu0 %v211
    %v230 = vpop.f32.mrf.mxu0
    %v231 = vadd.f32 0.0, %v230
    %232 = vdwg.mxu0
    %v233 = vadd.f32 %v184, %v231
    %v234 = vxor.u32 %v233, 2147483648
    %v235 = vmul.f32 %v234, 1.442695
    %v236 = vpow.pop %v235
    %v237 = vadd.f32 %v236, 1.0
    %v238 = vrcp.pop %v237
    %v239 = vmul.f32 %v237, %v238
    %v240 = vsub.f32 1.0, %v239
    %v241 = vmul.f32 %v238, %v240
    %v242 = vadd.f32 %v238, %v241
    %vm243 = vweird.f32 %v237
    %vm244 = vweird.f32 %v238
    %vm245 = vmor %vm243, %vm244
    %v246 = vsel %vm245, %v238, %v242
    %v247 = vand.u32 2147483647, %v237
    %vm248 = vcmp.eq.f32.partialorder %v247, 8.507059e+37
    %v249 = vand.u32 %v237, 2147483648
    %v250 = vor.u32 1.1754944e-38, %v249
    %v251 = vsel %vm248, %v250, %v246
    %v252 = vmul.f32 1.0, %v251
    %v253 = vmul.f32 %v252, 2.0
    %v254 = vsub.f32 %v253, 1.0
    %v255 = vmul.f32 %v252, 0.0
    %257 = vrot.lane.b32.xlu0 %v254, 64
    %v258 = vpop.permute.xlu0 %257
    %v260 = vmul.f32 %v252, %v258
    %262 = vrot.lane.b32.xlu0 %v260, 32
    %v263 = vpop.permute.xlu0 %262
    %v265 = vadd.f32 %v255, %v263
    %v266 = vtanh.pop %v265
    %268 = vrot.lane.b32.xlu0 %v266, 64
    %v269 = vpop.permute.xlu0 %268
    %v271 = vmul.f32 %v252, %v269
    %273 = vrot.lane.b32.xlu0 %v271, 32
    %v274 = vpop.permute.xlu0 %273
    %v275 = vsel %vm138, %v274, 0
    %277 = vmatpush.msra.mxu0 0.0
    %278 = vmatpush.msra.mxu0 0.0
    %279 = vmatpush.msra.mxu0 0.0
    %280 = vmatpush.msra.mxu0 0.0
    %281 = vmatpush.msra.mxu0 0.0
    %282 = vmatpush.msra.mxu0 0.0
    %283 = vmatpush.msra.mxu0 0.0
    %284 = vmatpush.msra.mxu0 0.0
    %285 = vmatpush.msra.mxu0 0.0
    %286 = vmatpush.msra.mxu0 0.0
    %287 = vmatpush.msra.mxu0 0.0
    %288 = vmatpush.msra.mxu0 0.0
    %289 = vmatpush.msra.mxu0 %v112
    %290 = vmatpush.msra.mxu0 %v111
    %291 = vmatpush.msra.mxu0 %v110
    %292 = vmatpush.msra.mxu0 %v109
    %293 = vmatmul.f32.gmra.mxu0 %v275
    %v294 = vpop.f32.mrf.mxu0
    %v295 = vadd.f32 %v123, %v294
    %296 = vdwg.mxu0
    %297 = vmatpush.msra.mxu0 0.0
    %298 = vmatpush.msra.mxu0 0.0
    %299 = vmatpush.msra.mxu0 0.0
    %300 = vmatpush.msra.mxu0 0.0
    %301 = vmatpush.msra.mxu0 0.0
    %302 = vmatpush.msra.mxu0 0.0
    %303 = vmatpush.msra.mxu0 0.0
    %304 = vmatpush.msra.mxu0 0.0
    %305 = vmatpush.msra.mxu0 0.0
    %306 = vmatpush.msra.mxu0 0.0
    %307 = vmatpush.msra.mxu0 0.0
    %308 = vmatpush.msra.mxu0 0.0
    %309 = vmatpush.msra.mxu0 %v120
    %310 = vmatpush.msra.mxu0 %v119
    %311 = vmatpush.msra.mxu0 %v118
    %312 = vmatpush.msra.mxu0 %v117
    %313 = vmatmul.f32.gmra.mxu0 %v211
    %v314 = vpop.f32.mrf.mxu0
    %v315 = vadd.f32 0.0, %v314
    %316 = vdwg.mxu0
    %v317 = vadd.f32 %v295, %v315
    %v318 = vxor.u32 %v317, 2147483648
    %v319 = vmul.f32 %v318, 1.442695
    %v320 = vpow.pop %v319
    %v321 = vadd.f32 %v320, 1.0
    %v322 = vrcp.pop %v321
    %v323 = vmul.f32 %v321, %v322
    %v324 = vsub.f32 1.0, %v323
    %v325 = vmul.f32 %v322, %v324
    %v326 = vadd.f32 %v322, %v325
    %vm327 = vweird.f32 %v321
    %vm328 = vweird.f32 %v322
    %vm329 = vmor %vm327, %vm328
    %v330 = vsel %vm329, %v322, %v326
    %v331 = vand.u32 2147483647, %v321
    %vm332 = vcmp.eq.f32.partialorder %v331, 8.507059e+37
    %v333 = vand.u32 %v321, 2147483648
    %v334 = vor.u32 1.1754944e-38, %v333
    %v335 = vsel %vm332, %v334, %v330
    %v336 = vmul.f32 1.0, %v335
    %v337 = vmul.f32 %v336, 2.0
    %v338 = vsub.f32 %v337, 1.0
    %v339 = vmul.f32 %v336, 0.0
    %341 = vrot.lane.b32.xlu0 %v338, 64
    %v342 = vpop.permute.xlu0 %341
    %v344 = vmul.f32 %v336, %v342
    %346 = vrot.lane.b32.xlu0 %v344, 32
    %v347 = vpop.permute.xlu0 %346
    %v349 = vadd.f32 %v339, %v347
    %v350 = vtanh.pop %v349
    %352 = vrot.lane.b32.xlu0 %v350, 64
    %v353 = vpop.permute.xlu0 %352
    %v355 = vmul.f32 %v336, %v353
    %357 = vrot.lane.b32.xlu0 %v355, 32
    %v358 = vpop.permute.xlu0 %357
    %360 = vst.msk [vmem:[#allocation11] sm:$0xff] %vm138, %v358
    %361 = vmatpush.msra.mxu0 0.0
    %362 = vmatpush.msra.mxu0 0.0
    %363 = vmatpush.msra.mxu0 0.0
    %364 = vmatpush.msra.mxu0 0.0
    %365 = vmatpush.msra.mxu0 0.0
    %366 = vmatpush.msra.mxu0 0.0
    %367 = vmatpush.msra.mxu0 0.0
    %368 = vmatpush.msra.mxu0 0.0
    %369 = vmatpush.msra.mxu0 0.0
    %370 = vmatpush.msra.mxu0 0.0
    %371 = vmatpush.msra.mxu0 0.0
    %372 = vmatpush.msra.mxu0 0.0
    %373 = vmatpush.msra.mxu0 %v116
    %374 = vmatpush.msra.mxu0 %v115
    %375 = vmatpush.msra.mxu0 %v114
    %376 = vmatpush.msra.mxu0 %v113
    %377 = vmatmul.f32.gmra.mxu0 %v275
    %v378 = vpop.f32.mrf.mxu0
    %v379 = vadd.f32 0.0, %v378
    %380 = vdwg.mxu0
    %v381 = vadd.f32 %v187, %v379
    %v382 = vxor.u32 %v381, 2147483648
    %v383 = vmul.f32 %v382, 1.442695
    %v384 = vpow.pop %v383
    %v385 = vadd.f32 %v384, 1.0
    %v386 = vrcp.pop %v385
    %v387 = vmul.f32 %v385, %v386
    %v388 = vsub.f32 1.0, %v387
    %v389 = vmul.f32 %v386, %v388
    %v390 = vadd.f32 %v386, %v389
    %vm391 = vweird.f32 %v385
    %vm392 = vweird.f32 %v386
    %vm393 = vmor %vm391, %vm392
    %v394 = vsel %vm393, %v386, %v390
    %v395 = vand.u32 2147483647, %v385
    %vm396 = vcmp.eq.f32.partialorder %v395, 8.507059e+37
    %v397 = vand.u32 %v385, 2147483648
    %v398 = vor.u32 1.1754944e-38, %v397
    %v399 = vsel %vm396, %v398, %v394
    %v400 = vmul.f32 1.0, %v399
    %v401 = vmul.f32 %v400, 2.0
    %v402 = vsub.f32 %v401, 1.0
    %v403 = vmul.f32 %v400, %v265
    %405 = vrot.lane.b32.xlu0 %v402, 64
    %v406 = vpop.permute.xlu0 %405
    %v408 = vmul.f32 %v400, %v406
    %410 = vrot.lane.b32.xlu0 %v408, 32
    %v411 = vpop.permute.xlu0 %410
    %v413 = vadd.f32 %v403, %v411
    %v414 = vtanh.pop %v413
    %416 = vrot.lane.b32.xlu0 %v414, 64
    %v417 = vpop.permute.xlu0 %416
    %v419 = vmul.f32 %v400, %v417
    %421 = vrot.lane.b32.xlu0 %v419, 32
    %v422 = vpop.permute.xlu0 %421
    %v423 = vsel %vm138, %v422, 0
    %425 = vmatpush.msra.mxu0 0.0
    %426 = vmatpush.msra.mxu0 0.0
    %427 = vmatpush.msra.mxu0 0.0
    %428 = vmatpush.msra.mxu0 0.0
    %429 = vmatpush.msra.mxu0 0.0
    %430 = vmatpush.msra.mxu0 0.0
    %431 = vmatpush.msra.mxu0 0.0
    %432 = vmatpush.msra.mxu0 0.0
    %433 = vmatpush.msra.mxu0 0.0
    %434 = vmatpush.msra.mxu0 0.0
    %435 = vmatpush.msra.mxu0 0.0
    %436 = vmatpush.msra.mxu0 0.0
    %437 = vmatpush.msra.mxu0 %v112
    %438 = vmatpush.msra.mxu0 %v111
    %439 = vmatpush.msra.mxu0 %v110
    %440 = vmatpush.msra.mxu0 %v109
    %441 = vmatmul.f32.gmra.mxu0 %v423
    %v442 = vpop.f32.mrf.mxu0
    %v443 = vadd.f32 %v123, %v442
    %444 = vdwg.mxu0
    %v445 = vsel %vm138, %v358, 0
    %447 = vmatpush.msra.mxu0 0.0
    %448 = vmatpush.msra.mxu0 0.0
    %449 = vmatpush.msra.mxu0 0.0
    %450 = vmatpush.msra.mxu0 0.0
    %451 = vmatpush.msra.mxu0 0.0
    %452 = vmatpush.msra.mxu0 0.0
    %453 = vmatpush.msra.mxu0 0.0
    %454 = vmatpush.msra.mxu0 0.0
    %455 = vmatpush.msra.mxu0 0.0
    %456 = vmatpush.msra.mxu0 0.0
    %457 = vmatpush.msra.mxu0 0.0
    %458 = vmatpush.msra.mxu0 0.0
    %459 = vmatpush.msra.mxu0 %v120
    %460 = vmatpush.msra.mxu0 %v119
    %461 = vmatpush.msra.mxu0 %v118
    %462 = vmatpush.msra.mxu0 %v117
    %463 = vmatmul.f32.gmra.mxu0 %v445
    %v464 = vpop.f32.mrf.mxu0
    %v465 = vadd.f32 0.0, %v464
    %466 = vdwg.mxu0
    %v467 = vadd.f32 %v443, %v465
    %v468 = vxor.u32 %v467, 2147483648
    %v469 = vmul.f32 %v468, 1.442695
    %v470 = vpow.pop %v469
    %v471 = vadd.f32 %v470, 1.0
    %v472 = vrcp.pop %v471
    %v473 = vmul.f32 %v471, %v472
    %v474 = vsub.f32 1.0, %v473
    %v475 = vmul.f32 %v472, %v474
    %v476 = vadd.f32 %v472, %v475
    %vm477 = vweird.f32 %v471
    %vm478 = vweird.f32 %v472
    %vm479 = vmor %vm477, %vm478
    %v480 = vsel %vm479, %v472, %v476
    %v481 = vand.u32 2147483647, %v471
    %vm482 = vcmp.eq.f32.partialorder %v481, 8.507059e+37
    %v483 = vand.u32 %v471, 2147483648
    %v484 = vor.u32 1.1754944e-38, %v483
    %v485 = vsel %vm482, %v484, %v480
    %v486 = vmul.f32 1.0, %v485
    %v487 = vmul.f32 %v486, 2.0
    %v488 = vsub.f32 %v487, 1.0
    %v489 = vmul.f32 %v486, %v349
    %491 = vrot.lane.b32.xlu0 %v488, 64
    %v492 = vpop.permute.xlu0 %491
    %v494 = vmul.f32 %v486, %v492
    %496 = vrot.lane.b32.xlu0 %v494, 32
    %v497 = vpop.permute.xlu0 %496
    %v499 = vadd.f32 %v489, %v497
    %v500 = vtanh.pop %v499
    %502 = vrot.lane.b32.xlu0 %v500, 64
    %v503 = vpop.permute.xlu0 %502
    %v505 = vmul.f32 %v486, %v503
    %507 = vrot.lane.b32.xlu0 %v505, 32
    %v508 = vpop.permute.xlu0 %507
    %s510 = scalar_lea.vmem [#allocation11], 8
    %511 = vst.msk [vmem:[%s510] sm:$0xff] %vm138, %v508
    %512 = vmatpush.msra.mxu0 0.0
    %513 = vmatpush.msra.mxu0 0.0
    %514 = vmatpush.msra.mxu0 0.0
    %515 = vmatpush.msra.mxu0 0.0
    %516 = vmatpush.msra.mxu0 0.0
    %517 = vmatpush.msra.mxu0 0.0
    %518 = vmatpush.msra.mxu0 0.0
    %519 = vmatpush.msra.mxu0 0.0
    %520 = vmatpush.msra.mxu0 0.0
    %521 = vmatpush.msra.mxu0 0.0
    %522 = vmatpush.msra.mxu0 0.0
    %523 = vmatpush.msra.mxu0 0.0
    %524 = vmatpush.msra.mxu0 %v116
    %525 = vmatpush.msra.mxu0 %v115
    %526 = vmatpush.msra.mxu0 %v114
    %527 = vmatpush.msra.mxu0 %v113
    %528 = vmatmul.f32.gmra.mxu0 %v423
    %v529 = vpop.f32.mrf.mxu0
    %v530 = vadd.f32 0.0, %v529
    %531 = vdwg.mxu0
    %v532 = vadd.f32 %v190, %v530
    %v533 = vxor.u32 %v532, 2147483648
    %v534 = vmul.f32 %v533, 1.442695
    %v535 = vpow.pop %v534
    %v536 = vadd.f32 %v535, 1.0
    %v537 = vrcp.pop %v536
    %v538 = vmul.f32 %v536, %v537
    %v539 = vsub.f32 1.0, %v538
    %v540 = vmul.f32 %v537, %v539
    %v541 = vadd.f32 %v537, %v540
    %vm542 = vweird.f32 %v536
    %vm543 = vweird.f32 %v537
    %vm544 = vmor %vm542, %vm543
    %v545 = vsel %vm544, %v537, %v541
    %v546 = vand.u32 2147483647, %v536
    %vm547 = vcmp.eq.f32.partialorder %v546, 8.507059e+37
    %v548 = vand.u32 %v536, 2147483648
    %v549 = vor.u32 1.1754944e-38, %v548
    %v550 = vsel %vm547, %v549, %v545
    %v551 = vmul.f32 1.0, %v550
    %v552 = vmul.f32 %v551, 2.0
    %v553 = vsub.f32 %v552, 1.0
    %v554 = vmul.f32 %v551, %v413
    %556 = vrot.lane.b32.xlu0 %v553, 64
    %v557 = vpop.permute.xlu0 %556
    %v559 = vmul.f32 %v551, %v557
    %561 = vrot.lane.b32.xlu0 %v559, 32
    %v562 = vpop.permute.xlu0 %561
    %v564 = vadd.f32 %v554, %v562
    %v565 = vtanh.pop %v564
    %567 = vrot.lane.b32.xlu0 %v565, 64
    %v568 = vpop.permute.xlu0 %567
    %v570 = vmul.f32 %v551, %v568
    %572 = vrot.lane.b32.xlu0 %v570, 32
    %v573 = vpop.permute.xlu0 %572
    %v574 = vsel %vm138, %v573, 0
    %576 = vmatpush.msra.mxu0 0.0
    %577 = vmatpush.msra.mxu0 0.0
    %578 = vmatpush.msra.mxu0 0.0
    %579 = vmatpush.msra.mxu0 0.0
    %580 = vmatpush.msra.mxu0 0.0
    %581 = vmatpush.msra.mxu0 0.0
    %582 = vmatpush.msra.mxu0 0.0
    %583 = vmatpush.msra.mxu0 0.0
    %584 = vmatpush.msra.mxu0 0.0
    %585 = vmatpush.msra.mxu0 0.0
    %586 = vmatpush.msra.mxu0 0.0
    %587 = vmatpush.msra.mxu0 0.0
    %588 = vmatpush.msra.mxu0 %v112
    %589 = vmatpush.msra.mxu0 %v111
    %590 = vmatpush.msra.mxu0 %v110
    %591 = vmatpush.msra.mxu0 %v109
    %592 = vmatmul.f32.gmra.mxu0 %v574
    %v593 = vpop.f32.mrf.mxu0
    %v594 = vadd.f32 %v123, %v593
    %595 = vdwg.mxu0
    %v596 = vsel %vm138, %v508, 0
    %598 = vmatpush.msra.mxu0 0.0
    %599 = vmatpush.msra.mxu0 0.0
    %600 = vmatpush.msra.mxu0 0.0
    %601 = vmatpush.msra.mxu0 0.0
    %602 = vmatpush.msra.mxu0 0.0
    %603 = vmatpush.msra.mxu0 0.0
    %604 = vmatpush.msra.mxu0 0.0
    %605 = vmatpush.msra.mxu0 0.0
    %606 = vmatpush.msra.mxu0 0.0
    %607 = vmatpush.msra.mxu0 0.0
    %608 = vmatpush.msra.mxu0 0.0
    %609 = vmatpush.msra.mxu0 0.0
    %610 = vmatpush.msra.mxu0 %v120
    %611 = vmatpush.msra.mxu0 %v119
    %612 = vmatpush.msra.mxu0 %v118
    %613 = vmatpush.msra.mxu0 %v117
    %614 = vmatmul.f32.gmra.mxu0 %v596
    %v615 = vpop.f32.mrf.mxu0
    %v616 = vadd.f32 0.0, %v615
    %617 = vdwg.mxu0
    %v618 = vadd.f32 %v594, %v616
    %v619 = vxor.u32 %v618, 2147483648
    %v620 = vmul.f32 %v619, 1.442695
    %v621 = vpow.pop %v620
    %v622 = vadd.f32 %v621, 1.0
    %v623 = vrcp.pop %v622
    %v624 = vmul.f32 %v622, %v623
    %v625 = vsub.f32 1.0, %v624
    %v626 = vmul.f32 %v623, %v625
    %v627 = vadd.f32 %v623, %v626
    %vm628 = vweird.f32 %v622
    %vm629 = vweird.f32 %v623
    %vm630 = vmor %vm628, %vm629
    %v631 = vsel %vm630, %v623, %v627
    %v632 = vand.u32 2147483647, %v622
    %vm633 = vcmp.eq.f32.partialorder %v632, 8.507059e+37
    %v634 = vand.u32 %v622, 2147483648
    %v635 = vor.u32 1.1754944e-38, %v634
    %v636 = vsel %vm633, %v635, %v631
    %v637 = vmul.f32 1.0, %v636
    %v638 = vmul.f32 %v637, 2.0
    %v639 = vsub.f32 %v638, 1.0
    %v640 = vmul.f32 %v637, %v499
    %642 = vrot.lane.b32.xlu0 %v639, 64
    %v643 = vpop.permute.xlu0 %642
    %v645 = vmul.f32 %v637, %v643
    %647 = vrot.lane.b32.xlu0 %v645, 32
    %v648 = vpop.permute.xlu0 %647
    %v650 = vadd.f32 %v640, %v648
    %v651 = vtanh.pop %v650
    %653 = vrot.lane.b32.xlu0 %v651, 64
    %v654 = vpop.permute.xlu0 %653
    %v656 = vmul.f32 %v637, %v654
    %658 = vrot.lane.b32.xlu0 %v656, 32
    %v659 = vpop.permute.xlu0 %658
    %s661 = scalar_lea.vmem [#allocation11], 16
    %662 = vst.msk [vmem:[%s661] sm:$0xff] %vm138, %v659
    %663 = vmatpush.msra.mxu0 0.0
    %664 = vmatpush.msra.mxu0 0.0
    %665 = vmatpush.msra.mxu0 0.0
    %666 = vmatpush.msra.mxu0 0.0
    %667 = vmatpush.msra.mxu0 0.0
    %668 = vmatpush.msra.mxu0 0.0
    %669 = vmatpush.msra.mxu0 0.0
    %670 = vmatpush.msra.mxu0 0.0
    %671 = vmatpush.msra.mxu0 0.0
    %672 = vmatpush.msra.mxu0 0.0
    %673 = vmatpush.msra.mxu0 0.0
    %674 = vmatpush.msra.mxu0 0.0
    %675 = vmatpush.msra.mxu0 %v116
    %676 = vmatpush.msra.mxu0 %v115
    %677 = vmatpush.msra.mxu0 %v114
    %678 = vmatpush.msra.mxu0 %v113
    %679 = vmatmul.f32.gmra.mxu0 %v574
    %v680 = vpop.f32.mrf.mxu0
    %v681 = vadd.f32 0.0, %v680
    %682 = vdwg.mxu0
    %v683 = vadd.f32 %v193, %v681
    %v684 = vxor.u32 %v683, 2147483648
    %v685 = vmul.f32 %v684, 1.442695
    %v686 = vpow.pop %v685
    %v687 = vadd.f32 %v686, 1.0
    %v688 = vrcp.pop %v687
    %v689 = vmul.f32 %v687, %v688
    %v690 = vsub.f32 1.0, %v689
    %v691 = vmul.f32 %v688, %v690
    %v692 = vadd.f32 %v688, %v691
    %vm693 = vweird.f32 %v687
    %vm694 = vweird.f32 %v688
    %vm695 = vmor %vm693, %vm694
    %v696 = vsel %vm695, %v688, %v692
    %v697 = vand.u32 2147483647, %v687
    %vm698 = vcmp.eq.f32.partialorder %v697, 8.507059e+37
    %v699 = vand.u32 %v687, 2147483648
    %v700 = vor.u32 1.1754944e-38, %v699
    %v701 = vsel %vm698, %v700, %v696
    %v702 = vmul.f32 1.0, %v701
    %v703 = vmul.f32 %v702, 2.0
    %v704 = vsub.f32 %v703, 1.0
    %v705 = vmul.f32 %v702, %v564
    %707 = vrot.lane.b32.xlu0 %v704, 64
    %v708 = vpop.permute.xlu0 %707
    %v710 = vmul.f32 %v702, %v708
    %712 = vrot.lane.b32.xlu0 %v710, 32
    %v713 = vpop.permute.xlu0 %712
    %v715 = vadd.f32 %v705, %v713
    %v716 = vtanh.pop %v715
    %718 = vrot.lane.b32.xlu0 %v716, 64
    %v719 = vpop.permute.xlu0 %718
    %v721 = vmul.f32 %v702, %v719
    %723 = vrot.lane.b32.xlu0 %v721, 32
    %v724 = vpop.permute.xlu0 %723
    %v725 = vsel %vm138, %v724, 0
    %727 = vmatpush.msra.mxu0 0.0
    %728 = vmatpush.msra.mxu0 0.0
    %729 = vmatpush.msra.mxu0 0.0
    %730 = vmatpush.msra.mxu0 0.0
    %731 = vmatpush.msra.mxu0 0.0
    %732 = vmatpush.msra.mxu0 0.0
    %733 = vmatpush.msra.mxu0 0.0
    %734 = vmatpush.msra.mxu0 0.0
    %735 = vmatpush.msra.mxu0 0.0
    %736 = vmatpush.msra.mxu0 0.0
    %737 = vmatpush.msra.mxu0 0.0
    %738 = vmatpush.msra.mxu0 0.0
    %739 = vmatpush.msra.mxu0 %v112
    %740 = vmatpush.msra.mxu0 %v111
    %741 = vmatpush.msra.mxu0 %v110
    %742 = vmatpush.msra.mxu0 %v109
    %743 = vmatmul.f32.gmra.mxu0 %v725
    %v744 = vpop.f32.mrf.mxu0
    %v745 = vadd.f32 %v123, %v744
    %746 = vdwg.mxu0
    %v747 = vsel %vm138, %v659, 0
    %749 = vmatpush.msra.mxu0 0.0
    %750 = vmatpush.msra.mxu0 0.0
    %751 = vmatpush.msra.mxu0 0.0
    %752 = vmatpush.msra.mxu0 0.0
    %753 = vmatpush.msra.mxu0 0.0
    %754 = vmatpush.msra.mxu0 0.0
    %755 = vmatpush.msra.mxu0 0.0
    %756 = vmatpush.msra.mxu0 0.0
    %757 = vmatpush.msra.mxu0 0.0
    %758 = vmatpush.msra.mxu0 0.0
    %759 = vmatpush.msra.mxu0 0.0
    %760 = vmatpush.msra.mxu0 0.0
    %761 = vmatpush.msra.mxu0 %v120
    %762 = vmatpush.msra.mxu0 %v119
    %763 = vmatpush.msra.mxu0 %v118
    %764 = vmatpush.msra.mxu0 %v117
    %765 = vmatmul.f32.gmra.mxu0 %v747
    %v766 = vpop.f32.mrf.mxu0
    %v767 = vadd.f32 0.0, %v766
    %768 = vdwg.mxu0
    %v769 = vadd.f32 %v745, %v767
    %v770 = vxor.u32 %v769, 2147483648
    %v771 = vmul.f32 %v770, 1.442695
    %v772 = vpow.pop %v771
    %v773 = vadd.f32 %v772, 1.0
    %v774 = vrcp.pop %v773
    %v775 = vmul.f32 %v773, %v774
    %v776 = vsub.f32 1.0, %v775
    %v777 = vmul.f32 %v774, %v776
    %v778 = vadd.f32 %v774, %v777
    %vm779 = vweird.f32 %v773
    %vm780 = vweird.f32 %v774
    %vm781 = vmor %vm779, %vm780
    %v782 = vsel %vm781, %v774, %v778
    %v783 = vand.u32 2147483647, %v773
    %vm784 = vcmp.eq.f32.partialorder %v783, 8.507059e+37
    %v785 = vand.u32 %v773, 2147483648
    %v786 = vor.u32 1.1754944e-38, %v785
    %v787 = vsel %vm784, %v786, %v782
    %v788 = vmul.f32 1.0, %v787
    %v789 = vmul.f32 %v788, 2.0
    %v790 = vsub.f32 %v789, 1.0
    %v791 = vmul.f32 %v788, %v650
    %793 = vrot.lane.b32.xlu0 %v790, 64
    %v794 = vpop.permute.xlu0 %793
    %v796 = vmul.f32 %v788, %v794
    %798 = vrot.lane.b32.xlu0 %v796, 32
    %v799 = vpop.permute.xlu0 %798
    %v801 = vadd.f32 %v791, %v799
    %v802 = vtanh.pop %v801
    %804 = vrot.lane.b32.xlu0 %v802, 64
    %v805 = vpop.permute.xlu0 %804
    %v807 = vmul.f32 %v788, %v805
    %809 = vrot.lane.b32.xlu0 %v807, 32
    %v810 = vpop.permute.xlu0 %809
    %s812 = scalar_lea.vmem [#allocation11], 24
    %813 = vst.msk [vmem:[%s812] sm:$0xff] %vm138, %v810
    %814 = vmatpush.msra.mxu0 0.0
    %815 = vmatpush.msra.mxu0 0.0
    %816 = vmatpush.msra.mxu0 0.0
    %817 = vmatpush.msra.mxu0 0.0
    %818 = vmatpush.msra.mxu0 0.0
    %819 = vmatpush.msra.mxu0 0.0
    %820 = vmatpush.msra.mxu0 0.0
    %821 = vmatpush.msra.mxu0 0.0
    %822 = vmatpush.msra.mxu0 0.0
    %823 = vmatpush.msra.mxu0 0.0
    %824 = vmatpush.msra.mxu0 0.0
    %825 = vmatpush.msra.mxu0 0.0
    %826 = vmatpush.msra.mxu0 %v116
    %827 = vmatpush.msra.mxu0 %v115
    %828 = vmatpush.msra.mxu0 %v114
    %829 = vmatpush.msra.mxu0 %v113
    %830 = vmatmul.f32.gmra.mxu0 %v725
    %v831 = vpop.f32.mrf.mxu0
    %v832 = vadd.f32 0.0, %v831
    %833 = vdwg.mxu0
    %v834 = vadd.f32 %v196, %v832
    %v835 = vxor.u32 %v834, 2147483648
    %v836 = vmul.f32 %v835, 1.442695
    %v837 = vpow.pop %v836
    %v838 = vadd.f32 %v837, 1.0
    %v839 = vrcp.pop %v838
    %v840 = vmul.f32 %v838, %v839
    %v841 = vsub.f32 1.0, %v840
    %v842 = vmul.f32 %v839, %v841
    %v843 = vadd.f32 %v839, %v842
    %vm844 = vweird.f32 %v838
    %vm845 = vweird.f32 %v839
    %vm846 = vmor %vm844, %vm845
    %v847 = vsel %vm846, %v839, %v843
    %v848 = vand.u32 2147483647, %v838
    %vm849 = vcmp.eq.f32.partialorder %v848, 8.507059e+37
    %v850 = vand.u32 %v838, 2147483648
    %v851 = vor.u32 1.1754944e-38, %v850
    %v852 = vsel %vm849, %v851, %v847
    %v853 = vmul.f32 1.0, %v852
    %v854 = vmul.f32 %v853, 2.0
    %v855 = vsub.f32 %v854, 1.0
    %v856 = vmul.f32 %v853, %v715
    %858 = vrot.lane.b32.xlu0 %v855, 64
    %v859 = vpop.permute.xlu0 %858
    %v861 = vmul.f32 %v853, %v859
    %863 = vrot.lane.b32.xlu0 %v861, 32
    %v864 = vpop.permute.xlu0 %863
    %v866 = vadd.f32 %v856, %v864
    %v867 = vtanh.pop %v866
    %869 = vrot.lane.b32.xlu0 %v867, 64
    %v870 = vpop.permute.xlu0 %869
    %v872 = vmul.f32 %v853, %v870
    %874 = vrot.lane.b32.xlu0 %v872, 32
    %v875 = vpop.permute.xlu0 %874
    %v876 = vsel %vm138, %v875, 0
    %878 = vmatpush.msra.mxu0 0.0
    %879 = vmatpush.msra.mxu0 0.0
    %880 = vmatpush.msra.mxu0 0.0
    %881 = vmatpush.msra.mxu0 0.0
    %882 = vmatpush.msra.mxu0 0.0
    %883 = vmatpush.msra.mxu0 0.0
    %884 = vmatpush.msra.mxu0 0.0
    %885 = vmatpush.msra.mxu0 0.0
    %886 = vmatpush.msra.mxu0 0.0
    %887 = vmatpush.msra.mxu0 0.0
    %888 = vmatpush.msra.mxu0 0.0
    %889 = vmatpush.msra.mxu0 0.0
    %890 = vmatpush.msra.mxu0 %v112
    %891 = vmatpush.msra.mxu0 %v111
    %892 = vmatpush.msra.mxu0 %v110
    %893 = vmatpush.msra.mxu0 %v109
    %894 = vmatmul.f32.gmra.mxu0 %v876
    %v895 = vpop.f32.mrf.mxu0
    %v896 = vadd.f32 %v123, %v895
    %897 = vdwg.mxu0
    %v898 = vsel %vm138, %v810, 0
    %900 = vmatpush.msra.mxu0 0.0
    %901 = vmatpush.msra.mxu0 0.0
    %902 = vmatpush.msra.mxu0 0.0
    %903 = vmatpush.msra.mxu0 0.0
    %904 = vmatpush.msra.mxu0 0.0
    %905 = vmatpush.msra.mxu0 0.0
    %906 = vmatpush.msra.mxu0 0.0
    %907 = vmatpush.msra.mxu0 0.0
    %908 = vmatpush.msra.mxu0 0.0
    %909 = vmatpush.msra.mxu0 0.0
    %910 = vmatpush.msra.mxu0 0.0
    %911 = vmatpush.msra.mxu0 0.0
    %912 = vmatpush.msra.mxu0 %v120
    %913 = vmatpush.msra.mxu0 %v119
    %914 = vmatpush.msra.mxu0 %v118
    %915 = vmatpush.msra.mxu0 %v117
    %916 = vmatmul.f32.gmra.mxu0 %v898
    %v917 = vpop.f32.mrf.mxu0
    %v918 = vadd.f32 0.0, %v917
    %919 = vdwg.mxu0
    %v920 = vadd.f32 %v896, %v918
    %v921 = vxor.u32 %v920, 2147483648
    %v922 = vmul.f32 %v921, 1.442695
    %v923 = vpow.pop %v922
    %v924 = vadd.f32 %v923, 1.0
    %v925 = vrcp.pop %v924
    %v926 = vmul.f32 %v924, %v925
    %v927 = vsub.f32 1.0, %v926
    %v928 = vmul.f32 %v925, %v927
    %v929 = vadd.f32 %v925, %v928
    %vm930 = vweird.f32 %v924
    %vm931 = vweird.f32 %v925
    %vm932 = vmor %vm930, %vm931
    %v933 = vsel %vm932, %v925, %v929
    %v934 = vand.u32 2147483647, %v924
    %vm935 = vcmp.eq.f32.partialorder %v934, 8.507059e+37
    %v936 = vand.u32 %v924, 2147483648
    %v937 = vor.u32 1.1754944e-38, %v936
    %v938 = vsel %vm935, %v937, %v933
    %v939 = vmul.f32 1.0, %v938
    %v940 = vmul.f32 %v939, 2.0
    %v941 = vsub.f32 %v940, 1.0
    %v942 = vmul.f32 %v939, %v801
    %944 = vrot.lane.b32.xlu0 %v941, 64
    %v945 = vpop.permute.xlu0 %944
    %v947 = vmul.f32 %v939, %v945
    %949 = vrot.lane.b32.xlu0 %v947, 32
    %v950 = vpop.permute.xlu0 %949
    %v952 = vadd.f32 %v942, %v950
    %v953 = vtanh.pop %v952
    %955 = vrot.lane.b32.xlu0 %v953, 64
    %v956 = vpop.permute.xlu0 %955
    %v958 = vmul.f32 %v939, %v956
    %960 = vrot.lane.b32.xlu0 %v958, 32
    %v961 = vpop.permute.xlu0 %960
    %s963 = scalar_lea.vmem [#allocation11], 32
    %964 = vst.msk [vmem:[%s963] sm:$0xff] %vm138, %v961
    %965 = vmatpush.msra.mxu0 0.0
    %966 = vmatpush.msra.mxu0 0.0
    %967 = vmatpush.msra.mxu0 0.0
    %968 = vmatpush.msra.mxu0 0.0
    %969 = vmatpush.msra.mxu0 0.0
    %970 = vmatpush.msra.mxu0 0.0
    %971 = vmatpush.msra.mxu0 0.0
    %972 = vmatpush.msra.mxu0 0.0
    %973 = vmatpush.msra.mxu0 0.0
    %974 = vmatpush.msra.mxu0 0.0
    %975 = vmatpush.msra.mxu0 0.0
    %976 = vmatpush.msra.mxu0 0.0
    %977 = vmatpush.msra.mxu0 %v116
    %978 = vmatpush.msra.mxu0 %v115
    %979 = vmatpush.msra.mxu0 %v114
    %980 = vmatpush.msra.mxu0 %v113
    %981 = vmatmul.f32.gmra.mxu0 %v876
    %v982 = vpop.f32.mrf.mxu0
    %v983 = vadd.f32 0.0, %v982
    %984 = vdwg.mxu0
    %v985 = vadd.f32 %v199, %v983
    %v986 = vxor.u32 %v985, 2147483648
    %v987 = vmul.f32 %v986, 1.442695
    %v988 = vpow.pop %v987
    %v989 = vadd.f32 %v988, 1.0
    %v990 = vrcp.pop %v989
    %v991 = vmul.f32 %v989, %v990
    %v992 = vsub.f32 1.0, %v991
    %v993 = vmul.f32 %v990, %v992
    %v994 = vadd.f32 %v990, %v993
    %vm995 = vweird.f32 %v989
    %vm996 = vweird.f32 %v990
    %vm997 = vmor %vm995, %vm996
    %v998 = vsel %vm997, %v990, %v994
    %v999 = vand.u32 2147483647, %v989
    %vm1000 = vcmp.eq.f32.partialorder %v999, 8.507059e+37
    %v1001 = vand.u32 %v989, 2147483648
    %v1002 = vor.u32 1.1754944e-38, %v1001
    %v1003 = vsel %vm1000, %v1002, %v998
    %v1004 = vmul.f32 1.0, %v1003
    %v1005 = vmul.f32 %v1004, 2.0
    %v1006 = vsub.f32 %v1005, 1.0
    %v1007 = vmul.f32 %v1004, %v866
    %1009 = vrot.lane.b32.xlu0 %v1006, 64
    %v1010 = vpop.permute.xlu0 %1009
    %v1012 = vmul.f32 %v1004, %v1010
    %1014 = vrot.lane.b32.xlu0 %v1012, 32
    %v1015 = vpop.permute.xlu0 %1014
    %v1017 = vadd.f32 %v1007, %v1015
    %v1018 = vtanh.pop %v1017
    %1020 = vrot.lane.b32.xlu0 %v1018, 64
    %v1021 = vpop.permute.xlu0 %1020
    %v1023 = vmul.f32 %v1004, %v1021
    %1025 = vrot.lane.b32.xlu0 %v1023, 32
    %v1026 = vpop.permute.xlu0 %1025
    %v1027 = vsel %vm138, %v1026, 0
    %1029 = vmatpush.msra.mxu0 0.0
    %1030 = vmatpush.msra.mxu0 0.0
    %1031 = vmatpush.msra.mxu0 0.0
    %1032 = vmatpush.msra.mxu0 0.0
    %1033 = vmatpush.msra.mxu0 0.0
    %1034 = vmatpush.msra.mxu0 0.0
    %1035 = vmatpush.msra.mxu0 0.0
    %1036 = vmatpush.msra.mxu0 0.0
    %1037 = vmatpush.msra.mxu0 0.0
    %1038 = vmatpush.msra.mxu0 0.0
    %1039 = vmatpush.msra.mxu0 0.0
    %1040 = vmatpush.msra.mxu0 0.0
    %1041 = vmatpush.msra.mxu0 %v112
    %1042 = vmatpush.msra.mxu0 %v111
    %1043 = vmatpush.msra.mxu0 %v110
    %1044 = vmatpush.msra.mxu0 %v109
    %1045 = vmatmul.f32.gmra.mxu0 %v1027
    %v1046 = vpop.f32.mrf.mxu0
    %v1047 = vadd.f32 %v123, %v1046
    %1048 = vdwg.mxu0
    %v1049 = vsel %vm138, %v961, 0
    %1051 = vmatpush.msra.mxu0 0.0
    %1052 = vmatpush.msra.mxu0 0.0
    %1053 = vmatpush.msra.mxu0 0.0
    %1054 = vmatpush.msra.mxu0 0.0
    %1055 = vmatpush.msra.mxu0 0.0
    %1056 = vmatpush.msra.mxu0 0.0
    %1057 = vmatpush.msra.mxu0 0.0
    %1058 = vmatpush.msra.mxu0 0.0
    %1059 = vmatpush.msra.mxu0 0.0
    %1060 = vmatpush.msra.mxu0 0.0
    %1061 = vmatpush.msra.mxu0 0.0
    %1062 = vmatpush.msra.mxu0 0.0
    %1063 = vmatpush.msra.mxu0 %v120
    %1064 = vmatpush.msra.mxu0 %v119
    %1065 = vmatpush.msra.mxu0 %v118
    %1066 = vmatpush.msra.mxu0 %v117
    %1067 = vmatmul.f32.gmra.mxu0 %v1049
    %v1068 = vpop.f32.mrf.mxu0
    %v1069 = vadd.f32 0.0, %v1068
    %1070 = vdwg.mxu0
    %v1071 = vadd.f32 %v1047, %v1069
    %v1072 = vxor.u32 %v1071, 2147483648
    %v1073 = vmul.f32 %v1072, 1.442695
    %v1074 = vpow.pop %v1073
    %v1075 = vadd.f32 %v1074, 1.0
    %v1076 = vrcp.pop %v1075
    %v1077 = vmul.f32 %v1075, %v1076
    %v1078 = vsub.f32 1.0, %v1077
    %v1079 = vmul.f32 %v1076, %v1078
    %v1080 = vadd.f32 %v1076, %v1079
    %vm1081 = vweird.f32 %v1075
    %vm1082 = vweird.f32 %v1076
    %vm1083 = vmor %vm1081, %vm1082
    %v1084 = vsel %vm1083, %v1076, %v1080
    %v1085 = vand.u32 2147483647, %v1075
    %vm1086 = vcmp.eq.f32.partialorder %v1085, 8.507059e+37
    %v1087 = vand.u32 %v1075, 2147483648
    %v1088 = vor.u32 1.1754944e-38, %v1087
    %v1089 = vsel %vm1086, %v1088, %v1084
    %v1090 = vmul.f32 1.0, %v1089
    %v1091 = vmul.f32 %v1090, 2.0
    %v1092 = vsub.f32 %v1091, 1.0
    %v1093 = vmul.f32 %v1090, %v952
    %1095 = vrot.lane.b32.xlu0 %v1092, 64
    %v1096 = vpop.permute.xlu0 %1095
    %v1098 = vmul.f32 %v1090, %v1096
    %1100 = vrot.lane.b32.xlu0 %v1098, 32
    %v1101 = vpop.permute.xlu0 %1100
    %v1103 = vadd.f32 %v1093, %v1101
    %v1104 = vtanh.pop %v1103
    %1106 = vrot.lane.b32.xlu0 %v1104, 64
    %v1107 = vpop.permute.xlu0 %1106
    %v1109 = vmul.f32 %v1090, %v1107
    %1111 = vrot.lane.b32.xlu0 %v1109, 32
    %v1112 = vpop.permute.xlu0 %1111
    %s1114 = scalar_lea.vmem [#allocation11], 40
    %1115 = vst.msk [vmem:[%s1114] sm:$0xff] %vm138, %v1112
    %1116 = vmatpush.msra.mxu0 0.0
    %1117 = vmatpush.msra.mxu0 0.0
    %1118 = vmatpush.msra.mxu0 0.0
    %1119 = vmatpush.msra.mxu0 0.0
    %1120 = vmatpush.msra.mxu0 0.0
    %1121 = vmatpush.msra.mxu0 0.0
    %1122 = vmatpush.msra.mxu0 0.0
    %1123 = vmatpush.msra.mxu0 0.0
    %1124 = vmatpush.msra.mxu0 0.0
    %1125 = vmatpush.msra.mxu0 0.0
    %1126 = vmatpush.msra.mxu0 0.0
    %1127 = vmatpush.msra.mxu0 0.0
    %1128 = vmatpush.msra.mxu0 %v116
    %1129 = vmatpush.msra.mxu0 %v115
    %1130 = vmatpush.msra.mxu0 %v114
    %1131 = vmatpush.msra.mxu0 %v113
    %1132 = vmatmul.f32.gmra.mxu0 %v1027
    %v1133 = vpop.f32.mrf.mxu0
    %v1134 = vadd.f32 0.0, %v1133
    %1135 = vdwg.mxu0
    %v1136 = vadd.f32 %v202, %v1134
    %v1137 = vxor.u32 %v1136, 2147483648
    %v1138 = vmul.f32 %v1137, 1.442695
    %v1139 = vpow.pop %v1138
    %v1140 = vadd.f32 %v1139, 1.0
    %v1141 = vrcp.pop %v1140
    %v1142 = vmul.f32 %v1140, %v1141
    %v1143 = vsub.f32 1.0, %v1142
    %v1144 = vmul.f32 %v1141, %v1143
    %v1145 = vadd.f32 %v1141, %v1144
    %vm1146 = vweird.f32 %v1140
    %vm1147 = vweird.f32 %v1141
    %vm1148 = vmor %vm1146, %vm1147
    %v1149 = vsel %vm1148, %v1141, %v1145
    %v1150 = vand.u32 2147483647, %v1140
    %vm1151 = vcmp.eq.f32.partialorder %v1150, 8.507059e+37
    %v1152 = vand.u32 %v1140, 2147483648
    %v1153 = vor.u32 1.1754944e-38, %v1152
    %v1154 = vsel %vm1151, %v1153, %v1149
    %v1155 = vmul.f32 1.0, %v1154
    %v1156 = vmul.f32 %v1155, 2.0
    %v1157 = vsub.f32 %v1156, 1.0
    %v1158 = vmul.f32 %v1155, %v1017
    %1160 = vrot.lane.b32.xlu0 %v1157, 64
    %v1161 = vpop.permute.xlu0 %1160
    %v1163 = vmul.f32 %v1155, %v1161
    %1165 = vrot.lane.b32.xlu0 %v1163, 32
    %v1166 = vpop.permute.xlu0 %1165
    %v1168 = vadd.f32 %v1158, %v1166
    %v1169 = vtanh.pop %v1168
    %1171 = vrot.lane.b32.xlu0 %v1169, 64
    %v1172 = vpop.permute.xlu0 %1171
    %v1174 = vmul.f32 %v1155, %v1172
    %1176 = vrot.lane.b32.xlu0 %v1174, 32
    %v1177 = vpop.permute.xlu0 %1176
    %v1178 = vsel %vm138, %v1177, 0
    %1180 = vmatpush.msra.mxu0 0.0
    %1181 = vmatpush.msra.mxu0 0.0
    %1182 = vmatpush.msra.mxu0 0.0
    %1183 = vmatpush.msra.mxu0 0.0
    %1184 = vmatpush.msra.mxu0 0.0
    %1185 = vmatpush.msra.mxu0 0.0
    %1186 = vmatpush.msra.mxu0 0.0
    %1187 = vmatpush.msra.mxu0 0.0
    %1188 = vmatpush.msra.mxu0 0.0
    %1189 = vmatpush.msra.mxu0 0.0
    %1190 = vmatpush.msra.mxu0 0.0
    %1191 = vmatpush.msra.mxu0 0.0
    %1192 = vmatpush.msra.mxu0 %v112
    %1193 = vmatpush.msra.mxu0 %v111
    %1194 = vmatpush.msra.mxu0 %v110
    %1195 = vmatpush.msra.mxu0 %v109
    %1196 = vmatmul.f32.gmra.mxu0 %v1178
    %v1197 = vpop.f32.mrf.mxu0
    %v1198 = vadd.f32 %v123, %v1197
    %1199 = vdwg.mxu0
    %v1200 = vsel %vm138, %v1112, 0
    %1202 = vmatpush.msra.mxu0 0.0
    %1203 = vmatpush.msra.mxu0 0.0
    %1204 = vmatpush.msra.mxu0 0.0
    %1205 = vmatpush.msra.mxu0 0.0
    %1206 = vmatpush.msra.mxu0 0.0
    %1207 = vmatpush.msra.mxu0 0.0
    %1208 = vmatpush.msra.mxu0 0.0
    %1209 = vmatpush.msra.mxu0 0.0
    %1210 = vmatpush.msra.mxu0 0.0
    %1211 = vmatpush.msra.mxu0 0.0
    %1212 = vmatpush.msra.mxu0 0.0
    %1213 = vmatpush.msra.mxu0 0.0
    %1214 = vmatpush.msra.mxu0 %v120
    %1215 = vmatpush.msra.mxu0 %v119
    %1216 = vmatpush.msra.mxu0 %v118
    %1217 = vmatpush.msra.mxu0 %v117
    %1218 = vmatmul.f32.gmra.mxu0 %v1200
    %v1219 = vpop.f32.mrf.mxu0
    %v1220 = vadd.f32 0.0, %v1219
    %1221 = vdwg.mxu0
    %v1222 = vadd.f32 %v1198, %v1220
    %v1223 = vxor.u32 %v1222, 2147483648
    %v1224 = vmul.f32 %v1223, 1.442695
    %v1225 = vpow.pop %v1224
    %v1226 = vadd.f32 %v1225, 1.0
    %v1227 = vrcp.pop %v1226
    %v1228 = vmul.f32 %v1226, %v1227
    %v1229 = vsub.f32 1.0, %v1228
    %v1230 = vmul.f32 %v1227, %v1229
    %v1231 = vadd.f32 %v1227, %v1230
    %vm1232 = vweird.f32 %v1226
    %vm1233 = vweird.f32 %v1227
    %vm1234 = vmor %vm1232, %vm1233
    %v1235 = vsel %vm1234, %v1227, %v1231
    %v1236 = vand.u32 2147483647, %v1226
    %vm1237 = vcmp.eq.f32.partialorder %v1236, 8.507059e+37
    %v1238 = vand.u32 %v1226, 2147483648
    %v1239 = vor.u32 1.1754944e-38, %v1238
    %v1240 = vsel %vm1237, %v1239, %v1235
    %v1241 = vmul.f32 1.0, %v1240
    %v1242 = vmul.f32 %v1241, 2.0
    %v1243 = vsub.f32 %v1242, 1.0
    %v1244 = vmul.f32 %v1241, %v1103
    %1246 = vrot.lane.b32.xlu0 %v1243, 64
    %v1247 = vpop.permute.xlu0 %1246
    %v1249 = vmul.f32 %v1241, %v1247
    %1251 = vrot.lane.b32.xlu0 %v1249, 32
    %v1252 = vpop.permute.xlu0 %1251
    %v1254 = vadd.f32 %v1244, %v1252
    %v1255 = vtanh.pop %v1254
    %1257 = vrot.lane.b32.xlu0 %v1255, 64
    %v1258 = vpop.permute.xlu0 %1257
    %v1260 = vmul.f32 %v1241, %v1258
    %1262 = vrot.lane.b32.xlu0 %v1260, 32
    %v1263 = vpop.permute.xlu0 %1262
    %s1265 = scalar_lea.vmem [#allocation11], 48
    %1266 = vst.msk [vmem:[%s1265] sm:$0xff] %vm138, %v1263
    %1267 = vmatpush.msra.mxu0 0.0
    %1268 = vmatpush.msra.mxu0 0.0
    %1269 = vmatpush.msra.mxu0 0.0
    %1270 = vmatpush.msra.mxu0 0.0
    %1271 = vmatpush.msra.mxu0 0.0
    %1272 = vmatpush.msra.mxu0 0.0
    %1273 = vmatpush.msra.mxu0 0.0
    %1274 = vmatpush.msra.mxu0 0.0
    %1275 = vmatpush.msra.mxu0 0.0
    %1276 = vmatpush.msra.mxu0 0.0
    %1277 = vmatpush.msra.mxu0 0.0
    %1278 = vmatpush.msra.mxu0 0.0
    %1279 = vmatpush.msra.mxu0 %v116
    %1280 = vmatpush.msra.mxu0 %v115
    %1281 = vmatpush.msra.mxu0 %v114
    %1282 = vmatpush.msra.mxu0 %v113
    %1283 = vmatmul.f32.gmra.mxu0 %v1178
    %v1284 = vpop.f32.mrf.mxu0
    %v1285 = vadd.f32 0.0, %v1284
    %1286 = vdwg.mxu0
    %v1287 = vadd.f32 %v205, %v1285
    %v1288 = vxor.u32 %v1287, 2147483648
    %v1289 = vmul.f32 %v1288, 1.442695
    %v1290 = vpow.pop %v1289
    %v1291 = vadd.f32 %v1290, 1.0
    %v1292 = vrcp.pop %v1291
    %v1293 = vmul.f32 %v1291, %v1292
    %v1294 = vsub.f32 1.0, %v1293
    %v1295 = vmul.f32 %v1292, %v1294
    %v1296 = vadd.f32 %v1292, %v1295
    %vm1297 = vweird.f32 %v1291
    %vm1298 = vweird.f32 %v1292
    %vm1299 = vmor %vm1297, %vm1298
    %v1300 = vsel %vm1299, %v1292, %v1296
    %v1301 = vand.u32 2147483647, %v1291
    %vm1302 = vcmp.eq.f32.partialorder %v1301, 8.507059e+37
    %v1303 = vand.u32 %v1291, 2147483648
    %v1304 = vor.u32 1.1754944e-38, %v1303
    %v1305 = vsel %vm1302, %v1304, %v1300
    %v1306 = vmul.f32 1.0, %v1305
    %v1307 = vmul.f32 %v1306, 2.0
    %v1308 = vsub.f32 %v1307, 1.0
    %v1309 = vmul.f32 %v1306, %v1168
    %1311 = vrot.lane.b32.xlu0 %v1308, 64
    %v1312 = vpop.permute.xlu0 %1311
    %v1314 = vmul.f32 %v1306, %v1312
    %1316 = vrot.lane.b32.xlu0 %v1314, 32
    %v1317 = vpop.permute.xlu0 %1316
    %v1319 = vadd.f32 %v1309, %v1317
    %v1320 = vtanh.pop %v1319
    %1322 = vrot.lane.b32.xlu0 %v1320, 64
    %v1323 = vpop.permute.xlu0 %1322
    %v1325 = vmul.f32 %v1306, %v1323
    %1327 = vrot.lane.b32.xlu0 %v1325, 32
    %v1328 = vpop.permute.xlu0 %1327
    %v1329 = vsel %vm138, %v1328, 0
    %1331 = vmatpush.msra.mxu0 0.0
    %1332 = vmatpush.msra.mxu0 0.0
    %1333 = vmatpush.msra.mxu0 0.0
    %1334 = vmatpush.msra.mxu0 0.0
    %1335 = vmatpush.msra.mxu0 0.0
    %1336 = vmatpush.msra.mxu0 0.0
    %1337 = vmatpush.msra.mxu0 0.0
    %1338 = vmatpush.msra.mxu0 0.0
    %1339 = vmatpush.msra.mxu0 0.0
    %1340 = vmatpush.msra.mxu0 0.0
    %1341 = vmatpush.msra.mxu0 0.0
    %1342 = vmatpush.msra.mxu0 0.0
    %1343 = vmatpush.msra.mxu0 %v112
    %1344 = vmatpush.msra.mxu0 %v111
    %1345 = vmatpush.msra.mxu0 %v110
    %1346 = vmatpush.msra.mxu0 %v109
    %1347 = vmatmul.f32.gmra.mxu0 %v1329
    %v1348 = vpop.f32.mrf.mxu0
    %v1349 = vadd.f32 %v123, %v1348
    %1350 = vdwg.mxu0
    %v1351 = vsel %vm138, %v1263, 0
    %1353 = vmatpush.msra.mxu0 0.0
    %1354 = vmatpush.msra.mxu0 0.0
    %1355 = vmatpush.msra.mxu0 0.0
    %1356 = vmatpush.msra.mxu0 0.0
    %1357 = vmatpush.msra.mxu0 0.0
    %1358 = vmatpush.msra.mxu0 0.0
    %1359 = vmatpush.msra.mxu0 0.0
    %1360 = vmatpush.msra.mxu0 0.0
    %1361 = vmatpush.msra.mxu0 0.0
    %1362 = vmatpush.msra.mxu0 0.0
    %1363 = vmatpush.msra.mxu0 0.0
    %1364 = vmatpush.msra.mxu0 0.0
    %1365 = vmatpush.msra.mxu0 %v120
    %1366 = vmatpush.msra.mxu0 %v119
    %1367 = vmatpush.msra.mxu0 %v118
    %1368 = vmatpush.msra.mxu0 %v117
    %1369 = vmatmul.f32.gmra.mxu0 %v1351
    %v1370 = vpop.f32.mrf.mxu0
    %v1371 = vadd.f32 0.0, %v1370
    %1372 = vdwg.mxu0
    %v1373 = vadd.f32 %v1349, %v1371
    %v1374 = vxor.u32 %v1373, 2147483648
    %v1375 = vmul.f32 %v1374, 1.442695
    %v1376 = vpow.pop %v1375
    %v1377 = vadd.f32 %v1376, 1.0
    %v1378 = vrcp.pop %v1377
    %v1379 = vmul.f32 %v1377, %v1378
    %v1380 = vsub.f32 1.0, %v1379
    %v1381 = vmul.f32 %v1378, %v1380
    %v1382 = vadd.f32 %v1378, %v1381
    %vm1383 = vweird.f32 %v1377
    %vm1384 = vweird.f32 %v1378
    %vm1385 = vmor %vm1383, %vm1384
    %v1386 = vsel %vm1385, %v1378, %v1382
    %v1387 = vand.u32 2147483647, %v1377
    %vm1388 = vcmp.eq.f32.partialorder %v1387, 8.507059e+37
    %v1389 = vand.u32 %v1377, 2147483648
    %v1390 = vor.u32 1.1754944e-38, %v1389
    %v1391 = vsel %vm1388, %v1390, %v1386
    %v1392 = vmul.f32 1.0, %v1391
    %v1393 = vmul.f32 %v1392, 2.0
    %v1394 = vsub.f32 %v1393, 1.0
    %v1395 = vmul.f32 %v1392, %v1254
    %1397 = vrot.lane.b32.xlu0 %v1394, 64
    %v1398 = vpop.permute.xlu0 %1397
    %v1400 = vmul.f32 %v1392, %v1398
    %1402 = vrot.lane.b32.xlu0 %v1400, 32
    %v1403 = vpop.permute.xlu0 %1402
    %v1405 = vadd.f32 %v1395, %v1403
    %v1406 = vtanh.pop %v1405
    %1408 = vrot.lane.b32.xlu0 %v1406, 64
    %v1409 = vpop.permute.xlu0 %1408
    %v1411 = vmul.f32 %v1392, %v1409
    %1413 = vrot.lane.b32.xlu0 %v1411, 32
    %v1414 = vpop.permute.xlu0 %1413
    %s1416 = scalar_lea.vmem [#allocation11], 56
    %1417 = vst.msk [vmem:[%s1416] sm:$0xff] %vm138, %v1414
    %1418 = vmatpush.msra.mxu0 0.0
    %1419 = vmatpush.msra.mxu0 0.0
    %1420 = vmatpush.msra.mxu0 0.0
    %1421 = vmatpush.msra.mxu0 0.0
    %1422 = vmatpush.msra.mxu0 0.0
    %1423 = vmatpush.msra.mxu0 0.0
    %1424 = vmatpush.msra.mxu0 0.0
    %1425 = vmatpush.msra.mxu0 0.0
    %1426 = vmatpush.msra.mxu0 0.0
    %1427 = vmatpush.msra.mxu0 0.0
    %1428 = vmatpush.msra.mxu0 0.0
    %1429 = vmatpush.msra.mxu0 0.0
    %1430 = vmatpush.msra.mxu0 %v116
    %1431 = vmatpush.msra.mxu0 %v115
    %1432 = vmatpush.msra.mxu0 %v114
    %1433 = vmatpush.msra.mxu0 %v113
    %1434 = vmatmul.f32.gmra.mxu0 %v1329
    %v1435 = vpop.f32.mrf.mxu0
    %v1436 = vadd.f32 0.0, %v1435
    %1437 = vdwg.mxu0
    %v1438 = vadd.f32 %v208, %v1436
    %v1439 = vxor.u32 %v1438, 2147483648
    %v1440 = vmul.f32 %v1439, 1.442695
    %v1441 = vpow.pop %v1440
    %v1442 = vadd.f32 %v1441, 1.0
    %v1443 = vrcp.pop %v1442
    %v1444 = vmul.f32 %v1442, %v1443
    %v1445 = vsub.f32 1.0, %v1444
    %v1446 = vmul.f32 %v1443, %v1445
    %v1447 = vadd.f32 %v1443, %v1446
    %vm1448 = vweird.f32 %v1442
    %vm1449 = vweird.f32 %v1443
    %vm1450 = vmor %vm1448, %vm1449
    %v1451 = vsel %vm1450, %v1443, %v1447
    %v1452 = vand.u32 2147483647, %v1442
    %vm1453 = vcmp.eq.f32.partialorder %v1452, 8.507059e+37
    %v1454 = vand.u32 %v1442, 2147483648
    %v1455 = vor.u32 1.1754944e-38, %v1454
    %v1456 = vsel %vm1453, %v1455, %v1451
    %v1457 = vmul.f32 1.0, %v1456
    %v1458 = vmul.f32 %v1457, 2.0
    %v1459 = vsub.f32 %v1458, 1.0
    %v1460 = vmul.f32 %v1457, %v1319
    %1462 = vrot.lane.b32.xlu0 %v1459, 64
    %v1463 = vpop.permute.xlu0 %1462
    %v1465 = vmul.f32 %v1457, %v1463
    %1467 = vrot.lane.b32.xlu0 %v1465, 32
    %v1468 = vpop.permute.xlu0 %1467
    %v1470 = vadd.f32 %v1460, %v1468
    %v1471 = vtanh.pop %v1470
    %1473 = vrot.lane.b32.xlu0 %v1471, 64
    %v1474 = vpop.permute.xlu0 %1473
    %v1476 = vmul.f32 %v1457, %v1474
    %1478 = vrot.lane.b32.xlu0 %v1476, 32
    %v1479 = vpop.permute.xlu0 %1478
    %v1480 = vsel %vm138, %v1479, 0
    %1482 = vmatpush.msra.mxu0 0.0
    %1483 = vmatpush.msra.mxu0 0.0
    %1484 = vmatpush.msra.mxu0 0.0
    %1485 = vmatpush.msra.mxu0 0.0
    %1486 = vmatpush.msra.mxu0 0.0
    %1487 = vmatpush.msra.mxu0 0.0
    %1488 = vmatpush.msra.mxu0 0.0
    %1489 = vmatpush.msra.mxu0 0.0
    %1490 = vmatpush.msra.mxu0 0.0
    %1491 = vmatpush.msra.mxu0 0.0
    %1492 = vmatpush.msra.mxu0 0.0
    %1493 = vmatpush.msra.mxu0 0.0
    %1494 = vmatpush.msra.mxu0 %v112
    %1495 = vmatpush.msra.mxu0 %v111
    %1496 = vmatpush.msra.mxu0 %v110
    %1497 = vmatpush.msra.mxu0 %v109
    %1498 = vmatmul.f32.gmra.mxu0 %v1480
    %v1499 = vpop.f32.mrf.mxu0
    %v1500 = vadd.f32 %v123, %v1499
    %1501 = vdwg.mxu0
    %v1502 = vsel %vm138, %v1414, 0
    %1504 = vmatpush.msra.mxu0 0.0
    %1505 = vmatpush.msra.mxu0 0.0
    %1506 = vmatpush.msra.mxu0 0.0
    %1507 = vmatpush.msra.mxu0 0.0
    %1508 = vmatpush.msra.mxu0 0.0
    %1509 = vmatpush.msra.mxu0 0.0
    %1510 = vmatpush.msra.mxu0 0.0
    %1511 = vmatpush.msra.mxu0 0.0
    %1512 = vmatpush.msra.mxu0 0.0
    %1513 = vmatpush.msra.mxu0 0.0
    %1514 = vmatpush.msra.mxu0 0.0
    %1515 = vmatpush.msra.mxu0 0.0
    %1516 = vmatpush.msra.mxu0 %v120
    %1517 = vmatpush.msra.mxu0 %v119
    %1518 = vmatpush.msra.mxu0 %v118
    %1519 = vmatpush.msra.mxu0 %v117
    %1520 = vmatmul.f32.gmra.mxu0 %v1502
    %v1521 = vpop.f32.mrf.mxu0
    %v1522 = vadd.f32 0.0, %v1521
    %1523 = vdwg.mxu0
    %v1524 = vadd.f32 %v1500, %v1522
    %v1525 = vxor.u32 %v1524, 2147483648
    %v1526 = vmul.f32 %v1525, 1.442695
    %v1527 = vpow.pop %v1526
    %v1528 = vadd.f32 %v1527, 1.0
    %v1529 = vrcp.pop %v1528
    %v1530 = vmul.f32 %v1528, %v1529
    %v1531 = vsub.f32 1.0, %v1530
    %v1532 = vmul.f32 %v1529, %v1531
    %v1533 = vadd.f32 %v1529, %v1532
    %vm1534 = vweird.f32 %v1528
    %vm1535 = vweird.f32 %v1529
    %vm1536 = vmor %vm1534, %vm1535
    %v1537 = vsel %vm1536, %v1529, %v1533
    %v1538 = vand.u32 2147483647, %v1528
    %vm1539 = vcmp.eq.f32.partialorder %v1538, 8.507059e+37
    %v1540 = vand.u32 %v1528, 2147483648
    %v1541 = vor.u32 1.1754944e-38, %v1540
    %v1542 = vsel %vm1539, %v1541, %v1537
    %v1543 = vmul.f32 1.0, %v1542
    %v1544 = vmul.f32 %v1543, 2.0
    %v1545 = vsub.f32 %v1544, 1.0
    %v1546 = vmul.f32 %v1543, %v1405
    %1548 = vrot.lane.b32.xlu0 %v1545, 64
    %v1549 = vpop.permute.xlu0 %1548
    %v1551 = vmul.f32 %v1543, %v1549
    %1553 = vrot.lane.b32.xlu0 %v1551, 32
    %v1554 = vpop.permute.xlu0 %1553
    %v1556 = vadd.f32 %v1546, %v1554
    %v1557 = vtanh.pop %v1556
    %1559 = vrot.lane.b32.xlu0 %v1557, 64
    %v1560 = vpop.permute.xlu0 %1559
    %v1562 = vmul.f32 %v1543, %v1560
    %1564 = vrot.lane.b32.xlu0 %v1562, 32
    %v1565 = vpop.permute.xlu0 %1564
    %s1567 = scalar_lea.vmem [#allocation11], 64
    %1568 = vst.msk [vmem:[%s1567] sm:$0xff] %vm138, %v1565
    // Predicated region
    $region50: #{tpu_custom_call.1} parent=1 // pred_check
      _
    $region51: #{tpu_custom_call.1} parent=1 // pred_check_branch
      %1570 = sbr.rel (0) target = $region53
    $region52: #{tpu_custom_call.1} parent=1 // pred_region
      %1572 = vsyncadd [#allocation4], 0
      %s1573 = sshll.u32 [#allocation11], 4
      %s1574 = int_to_ptr.vmem [resolvable:$true] %s1573
      %s1575 = sshll.u32 %s7, 4
      %s1576 = int_to_ptr.hbm [resolvable:$true] %s1575
      %1581 = dma.vmem_to_hbm [thread:$0]  %s1574, 1152, %s1576, [#allocation4], 128, 128, 8
    $region53: #{tpu_custom_call.1} parent=1 // pred_fallthru
      _
    // Predicated region
    $region54: #{tpu_custom_call.1} parent=1 // pred_check
      _
    $region55: #{tpu_custom_call.1} parent=1 // pred_check_branch
      %1583 = sbr.rel (0) target = $region57
    $region56: #{tpu_custom_call.1} parent=1 // pred_region
      %1585 = dma.done [#allocation4], 1152
    $region57: #{tpu_custom_call.1} parent=1 // pred_fallthru
      _
    %1586 = vsyncpa [#allocation3], 1
    %1587 = vsyncpa [#allocation6], 1
    %1588 = vsyncpa [#allocation9], 1
    %1589 = vsyncpa [#allocation4], 1

</llo_original>
